<compile_context>
chip_gen: v7x
topology: tpu7x:2x2x1
jax: 0.10.0
libtpu: 0.0.40
codegen_flags: <defaults>
</compile_context>

<pallas_src>
import jax
import jax.numpy as jnp
from jax.experimental import pallas as pl
from jax.experimental.pallas import tpu as pltpu


# ----------------------------------------------------------------------------
# Fused Pallas kernel: candidate-scoring MLP + one LSTM step
# ----------------------------------------------------------------------------
def _arg_policy_kernel(cand_ref, w1_ref, b1_ref, w2_ref, b2_ref, w3_ref,
                       b3_ref, xh_ref, c_ref, wxh_ref, blstm_ref,
                       scores_ref, h_out_ref, c_out_ref):
    # ---------------- MLP scorer: fc -> relu -> fc2 -> relu -> head ----------
    # bf16 operands on the MXU, f32 accumulation.
    s = jnp.dot(cand_ref[...].astype(jnp.bfloat16), w1_ref[...],
                preferred_element_type=jnp.float32) + b1_ref[...]
    s = jnp.maximum(s, 0.0)
    s = jnp.dot(s.astype(jnp.bfloat16), w2_ref[...],
                preferred_element_type=jnp.float32) + b2_ref[...]
    s = jnp.maximum(s, 0.0)
    # head (1024 -> 1): VPU multiply + XLU lane reduce against a (1, 1024) row.
    scores_ref[...] = (jnp.sum(s * w3_ref[...], axis=-1, keepdims=True)
                       + b3_ref[...])

    # ---------------- LSTM cell, one step ------------------------------------
    e = c_ref.shape[-1]
    gates = (jnp.dot(xh_ref[...], wxh_ref[...],
                     preferred_element_type=jnp.float32) + blstm_ref[...])
    # One EUP pass per nonlinearity over the whole 4E gate row, then per-gate
    # lane slices (E = 32 sub-vreg extracts; negligible at this size).
    sig = jax.nn.sigmoid(gates)
    tah = jnp.tanh(gates)
    i_g = sig[:, 0 * e:1 * e]
    f_g = sig[:, 1 * e:2 * e]
    g_g = tah[:, 2 * e:3 * e]
    o_g = sig[:, 3 * e:4 * e]
    c_new = f_g * c_ref[...] + i_g * g_g
    h_out_ref[...] = o_g * jnp.tanh(c_new)
    c_out_ref[...] = c_new


_VMEM = pl.BlockSpec(memory_space=pltpu.MemorySpace.VMEM)


@jax.jit
def _arg_policy_fused(candidates, w1, b1, w2, b2, w3_row, b3,
                      x_emb, h, c, w_xh, b_lstm):
    n, d = candidates.shape
    e = h.shape[-1]
    hid1 = w1.shape[1]
    hid2 = w2.shape[1]

    # Concatenate [x, h] once (tiny XLA op) so the LSTM cell is a single dot.
    xh = jnp.concatenate([x_emb, h], axis=-1)                    # (1, 2E)

    operands = (candidates, w1, b1, w2, b2, w3_row, b3, xh, c, w_xh, b_lstm)
    bytes_in = sum(int(a.size) * jnp.dtype(a.dtype).itemsize for a in operands)
    bytes_out = (n * 1 + 2 * e) * 4
    cost = pl.CostEstimate(
        flops=2 * n * (d * hid1 + hid1 * hid2 + hid2)
              + 2 * (2 * e) * (4 * e),
        transcendentals=2 * 4 * e + e,        # sigmoid+tanh on gates, tanh(c)
        bytes_accessed=bytes_in + bytes_out)

    scores, h_new, c_new = pl.pallas_call(
        _arg_policy_kernel,
        out_shape=(jax.ShapeDtypeStruct((n, 1), jnp.float32),
                   jax.ShapeDtypeStruct((1, e), jnp.float32),
                   jax.ShapeDtypeStruct((1, e), jnp.float32)),
        in_specs=[_VMEM] * 11,
        out_specs=(_VMEM, _VMEM, _VMEM),
        input_output_aliases={8: 2},          # c0 buffer reused for c1
        cost_estimate=cost,
    )(*operands)
    return scores, h_new, c_new


# ----------------------------------------------------------------------------
# ArgPolicy forward (mirrors the PyTorch module)
# ----------------------------------------------------------------------------
def arg_policy_forward(params, x, candidates, hidden):
    # Embedding row gather for the size-[1] index kept as plain JAX glue.
    if x.shape == (1,):
        x_emb = params["emb"][x]                                 # (1, E)
    else:
        x_emb = x
    h0, c0 = hidden
    scores, h1, c1 = _arg_policy_fused(
        candidates,
        params["w1"], params["b1"], params["w2"], params["b2"],
        params["w3_row"], params["b3"],
        x_emb, h0, c0, params["w_xh"], params["b_lstm"])
    return (h1, c1), scores


# Pure-JAX reference (f32 math on the same stored parameters).
def arg_policy_reference(params, x, candidates, hidden):
    x_emb = params["emb"][x] if x.shape == (1,) else x
    w1 = params["w1"].astype(jnp.float32)
    w2 = params["w2"].astype(jnp.float32)
    s = jnp.maximum(candidates @ w1 + params["b1"], 0.0)
    s = jnp.maximum(s @ w2 + params["b2"], 0.0)
    scores = s @ params["w3_row"].T + params["b3"]
    h0, c0 = hidden
    e = h0.shape[-1]
    gates = (x_emb @ params["w_xh"][:e] + h0 @ params["w_xh"][e:]
             + params["b_lstm"])
    i_g = jax.nn.sigmoid(gates[:, 0 * e:1 * e])
    f_g = jax.nn.sigmoid(gates[:, 1 * e:2 * e])
    g_g = jnp.tanh(gates[:, 2 * e:3 * e])
    o_g = jax.nn.sigmoid(gates[:, 3 * e:4 * e])
    c1 = f_g * c0 + i_g * g_g
    h1 = o_g * jnp.tanh(c1)
    return (h1, c1), scores


# ----------------------------------------------------------------------------
# Main
# ----------------------------------------------------------------------------
if __name__ == "__main__":
    TACTIC_SIZE = 16
    EMBED_DIM = 32                       # embedding_dim
    CAND_DIM = EMBED_DIM + 256 * 2       # fc input dim = E + 512
    N_CAND = 8                           # number of candidate arguments

    key = jax.random.PRNGKey(0)
    keys = jax.random.split(key, 12)

    def _init(k, shape, scale=0.05):
        return jax.random.normal(k, shape, jnp.float32) * scale

    params = {
        "emb":    _init(keys[0], (TACTIC_SIZE, EMBED_DIM)),
        # fc: (E+512) -> 512, fc2: 512 -> 1024  (bf16 storage, f32 accumulate)
        "w1":     _init(keys[1], (CAND_DIM, 512)).astype(jnp.bfloat16),
        "b1":     _init(keys[2], (1, 512)),
        "w2":     _init(keys[3], (512, 1024)).astype(jnp.bfloat16),
        "b2":     _init(keys[4], (1, 1024)),
        # head: 1024 -> 1 stored as a lane-dense (1, 1024) row + scalar bias
        "w3_row": _init(keys[5], (1, 1024)),
        "b3":     _init(keys[6], (1, 1)),
        # LSTM: [w_ih; w_hh] stacked -> (2E, 4E), gates [i|f|g|o],
        # bias = b_ih + b_hh folded together.
        "w_xh":   jnp.concatenate(
            [_init(keys[7], (EMBED_DIM, 4 * EMBED_DIM)),
             _init(keys[8], (EMBED_DIM, 4 * EMBED_DIM))], axis=0),
        "b_lstm": _init(keys[9], (1, 4 * EMBED_DIM)),
    }

    x_idx = jnp.array([3], dtype=jnp.int32)                       # shape (1,)
    candidates = _init(keys[10], (N_CAND, CAND_DIM), scale=1.0)   # (8, 544)
    h0 = _init(keys[11], (1, EMBED_DIM), scale=0.1)
    c0 = jnp.zeros((1, EMBED_DIM), jnp.float32)
    hidden = (h0, c0)

    (h1, c1), scores = arg_policy_forward(params, x_idx, candidates, hidden)
    jax.block_until_ready((h1, c1, scores))

    (h1_r, c1_r), scores_r = arg_policy_reference(params, x_idx, candidates,
                                                  hidden)
    assert scores.shape == (N_CAND, 1)
    assert h1.shape == (1, EMBED_DIM) and c1.shape == (1, EMBED_DIM)
    # bf16 weight storage + bf16 MXU operands -> loosened score tolerance.
    assert jnp.allclose(scores, scores_r, atol=5e-2, rtol=5e-2)
    # f32 LSTM path; tolerance covers MXU vs XLA matmul precision differences.
    assert jnp.allclose(h1, h1_r, atol=1e-3, rtol=1e-3)
    assert jnp.allclose(c1, c1_r, atol=1e-3, rtol=1e-3)

    print("KERNEL_OK")
</pallas_src>

<mosaic_0001>
module attributes {stable_mosaic.version = 11 : i64} {
  func.func @_arg_policy_kernel(%arg0: memref<8x544xf32, #tpu.memory_space<vmem>>, %arg1: memref<544x512xbf16, #tpu.memory_space<vmem>>, %arg2: memref<1x512xf32, #tpu.memory_space<vmem>>, %arg3: memref<512x1024xbf16, #tpu.memory_space<vmem>>, %arg4: memref<1x1024xf32, #tpu.memory_space<vmem>>, %arg5: memref<1x1024xf32, #tpu.memory_space<vmem>>, %arg6: memref<1x1xf32, #tpu.memory_space<vmem>>, %arg7: memref<1x64xf32, #tpu.memory_space<vmem>>, %arg8: memref<1x32xf32, #tpu.memory_space<vmem>>, %arg9: memref<64x128xf32, #tpu.memory_space<vmem>>, %arg10: memref<1x128xf32, #tpu.memory_space<vmem>>, %arg11: memref<8x1xf32, #tpu.memory_space<vmem>>, %arg12: memref<1x32xf32, #tpu.memory_space<vmem>>, %arg13: memref<1x32xf32, #tpu.memory_space<vmem>>) attributes {dimension_semantics = [], scalar_prefetch = 0 : i64, scratch_operands = 0 : i64, tpu.core_type = #tpu.core_type<tc>} {
    %c0 = arith.constant 0 : index
    %c0_0 = arith.constant 0 : index
    %0 = vector.load %arg0[%c0, %c0_0] : memref<8x544xf32, #tpu.memory_space<vmem>>, vector<8x544xf32>
    %1 = arith.truncf %0 : vector<8x544xf32> to vector<8x544xbf16>
    %c0_1 = arith.constant 0 : index
    %c0_2 = arith.constant 0 : index
    %2 = vector.load %arg1[%c0_1, %c0_2] : memref<544x512xbf16, #tpu.memory_space<vmem>>, vector<544x512xbf16>
    %cst = arith.constant dense<0.000000e+00> : vector<8x512xf32>
    %3 = tpu.matmul %1, %2, %cst {dimension_numbers = #tpu.dot_dimension_numbers<[1], [0], [0], [1], [0, 0, 1, 1], [], []>} : vector<8x544xbf16>, vector<544x512xbf16>, vector<8x512xf32> -> vector<8x512xf32>
    %c0_3 = arith.constant 0 : index
    %c0_4 = arith.constant 0 : index
    %4 = vector.load %arg2[%c0_3, %c0_4] : memref<1x512xf32, #tpu.memory_space<vmem>>, vector<1x512xf32>
    %5 = vector.broadcast %4 : vector<1x512xf32> to vector<8x512xf32>
    %6 = arith.addf %3, %5 : vector<8x512xf32>
    %cst_5 = arith.constant 0.000000e+00 : f32
    %7 = vector.broadcast %cst_5 : f32 to vector<8x512xf32>
    %8 = arith.maximumf %6, %7 : vector<8x512xf32>
    %9 = arith.truncf %8 : vector<8x512xf32> to vector<8x512xbf16>
    %c0_6 = arith.constant 0 : index
    %c0_7 = arith.constant 0 : index
    %10 = vector.load %arg3[%c0_6, %c0_7] : memref<512x1024xbf16, #tpu.memory_space<vmem>>, vector<512x1024xbf16>
    %cst_8 = arith.constant dense<0.000000e+00> : vector<8x1024xf32>
    %11 = tpu.matmul %9, %10, %cst_8 {dimension_numbers = #tpu.dot_dimension_numbers<[1], [0], [0], [1], [0, 0, 1, 1], [], []>} : vector<8x512xbf16>, vector<512x1024xbf16>, vector<8x1024xf32> -> vector<8x1024xf32>
    %c0_9 = arith.constant 0 : index
    %c0_10 = arith.constant 0 : index
    %12 = vector.load %arg4[%c0_9, %c0_10] : memref<1x1024xf32, #tpu.memory_space<vmem>>, vector<1x1024xf32>
    %13 = vector.broadcast %12 : vector<1x1024xf32> to vector<8x1024xf32>
    %14 = arith.addf %11, %13 : vector<8x1024xf32>
    %cst_11 = arith.constant 0.000000e+00 : f32
    %15 = vector.broadcast %cst_11 : f32 to vector<8x1024xf32>
    %16 = arith.maximumf %14, %15 : vector<8x1024xf32>
    %c0_12 = arith.constant 0 : index
    %c0_13 = arith.constant 0 : index
    %17 = vector.load %arg5[%c0_12, %c0_13] : memref<1x1024xf32, #tpu.memory_space<vmem>>, vector<1x1024xf32>
    %18 = vector.broadcast %17 : vector<1x1024xf32> to vector<8x1024xf32>
    %19 = arith.mulf %16, %18 : vector<8x1024xf32>
    %cst_14 = arith.constant dense<0.000000e+00> : vector<8xf32>
    %20 = vector.multi_reduction <add>, %19, %cst_14 [1] : vector<8x1024xf32> to vector<8xf32>
    %21 = vector.shape_cast %20 : vector<8xf32> to vector<8x1xf32>
    %c0_15 = arith.constant 0 : index
    %c0_16 = arith.constant 0 : index
    %22 = vector.load %arg6[%c0_15, %c0_16] : memref<1x1xf32, #tpu.memory_space<vmem>>, vector<1x1xf32>
    %23 = vector.broadcast %22 : vector<1x1xf32> to vector<8x1xf32>
    %24 = arith.addf %21, %23 : vector<8x1xf32>
    %c0_17 = arith.constant 0 : index
    %c0_18 = arith.constant 0 : index
    %25 = vector.load %arg11[%c0_17, %c0_18] : memref<8x1xf32, #tpu.memory_space<vmem>>, vector<8x1xf32>
    tpu.vector_store %arg11[%c0_17, %c0_18], %24 {strides = array<i32>} : memref<8x1xf32, #tpu.memory_space<vmem>>, vector<8x1xf32>,
    %c0_19 = arith.constant 0 : index
    %c0_20 = arith.constant 0 : index
    %26 = vector.load %arg7[%c0_19, %c0_20] : memref<1x64xf32, #tpu.memory_space<vmem>>, vector<1x64xf32>
    %c0_21 = arith.constant 0 : index
    %c0_22 = arith.constant 0 : index
    %27 = vector.load %arg9[%c0_21, %c0_22] : memref<64x128xf32, #tpu.memory_space<vmem>>, vector<64x128xf32>
    %cst_23 = arith.constant dense<0.000000e+00> : vector<1x128xf32>
    %28 = tpu.matmul %26, %27, %cst_23 {dimension_numbers = #tpu.dot_dimension_numbers<[1], [0], [0], [1], [0, 0, 1, 1], [], []>} : vector<1x64xf32>, vector<64x128xf32>, vector<1x128xf32> -> vector<1x128xf32>
    %c0_24 = arith.constant 0 : index
    %c0_25 = arith.constant 0 : index
    %29 = vector.load %arg10[%c0_24, %c0_25] : memref<1x128xf32, #tpu.memory_space<vmem>>, vector<1x128xf32>
    %30 = arith.addf %28, %29 : vector<1x128xf32>
    %31 = arith.negf %30 : vector<1x128xf32>
    %32 = math.exp %31 : vector<1x128xf32>
    %cst_26 = arith.constant 1.000000e+00 : f32
    %33 = vector.broadcast %cst_26 : f32 to vector<1x128xf32>
    %34 = arith.addf %33, %32 : vector<1x128xf32>
    %35 = arith.divf %33, %34 : vector<1x128xf32>
    %36 = math.tanh %30 : vector<1x128xf32>
    %37 = vector.extract_strided_slice %35 {offsets = [0, 0], sizes = [1, 32], strides = [1, 1]} : vector<1x128xf32> to vector<1x32xf32>
    %38 = vector.extract_strided_slice %35 {offsets = [0, 32], sizes = [1, 32], strides = [1, 1]} : vector<1x128xf32> to vector<1x32xf32>
    %39 = vector.extract_strided_slice %36 {offsets = [0, 64], sizes = [1, 32], strides = [1, 1]} : vector<1x128xf32> to vector<1x32xf32>
    %40 = vector.extract_strided_slice %35 {offsets = [0, 96], sizes = [1, 32], strides = [1, 1]} : vector<1x128xf32> to vector<1x32xf32>
    %c0_27 = arith.constant 0 : index
    %c0_28 = arith.constant 0 : index
    %41 = vector.load %arg8[%c0_27, %c0_28] : memref<1x32xf32, #tpu.memory_space<vmem>>, vector<1x32xf32>
    %42 = arith.mulf %38, %41 : vector<1x32xf32>
    %43 = arith.mulf %37, %39 : vector<1x32xf32>
    %44 = arith.addf %42, %43 : vector<1x32xf32>
    %45 = math.tanh %44 : vector<1x32xf32>
    %46 = arith.mulf %40, %45 : vector<1x32xf32>
    %c0_29 = arith.constant 0 : index
    %c0_30 = arith.constant 0 : index
    %47 = vector.load %arg12[%c0_29, %c0_30] : memref<1x32xf32, #tpu.memory_space<vmem>>, vector<1x32xf32>
    tpu.vector_store %arg12[%c0_29, %c0_30], %46 {strides = array<i32>} : memref<1x32xf32, #tpu.memory_space<vmem>>, vector<1x32xf32>,
    %c0_31 = arith.constant 0 : index
    %c0_32 = arith.constant 0 : index
    %48 = vector.load %arg13[%c0_31, %c0_32] : memref<1x32xf32, #tpu.memory_space<vmem>>, vector<1x32xf32>
    tpu.vector_store %arg13[%c0_31, %c0_32], %44 {strides = array<i32>} : memref<1x32xf32, #tpu.memory_space<vmem>>, vector<1x32xf32>,
    return
  }
}

</mosaic_0001>

<llo_original>
// kernel: _arg_policy_fused.1
$region0: #{_arg_policy_fused.1}
  #allocation0 [shape = 'u32[]', space=smem, size = 0x4, offset = 0x4, fixed_abs, tag = 'smem constant byte address 0x4 - core index']
  #allocation1 [shape = 'u32[144,128]{1,0:T(1,128)}', space=vmem, size = 0x12000, scoped, tag = 'internal scratch']
  #allocation2 [shape = 'f32[1,1]{1,0:T(1,128)S(1)}', space=vmem, size = 0x200, scoped, tag = 'scoped memory for _arg_policy_fused.1']
  %s0 = inlined_call_operand.vmem [shape: f32[8,544], index: 0, kind: input, shape index: {}]
  %s1 = inlined_call_operand.hbm [shape: bf16[544,512], index: 1, kind: input, shape index: {}]
  %s2 = inlined_call_operand.vmem [shape: f32[1,512], index: 2, kind: input, shape index: {}]
  %s3 = inlined_call_operand.hbm [shape: bf16[512,1024], index: 3, kind: input, shape index: {}]
  %s4 = inlined_call_operand.vmem [shape: f32[1,1024], index: 4, kind: input, shape index: {}]
  %s5 = inlined_call_operand.hbm [shape: f32[1,1024], index: 5, kind: input, shape index: {}]
  %s6 = inlined_call_operand.<no memory space> [shape: f32[1,1], index: 6, kind: input, shape index: {}]
  %s7 = inlined_call_operand.vmem [shape: f32[1,64], index: 7, kind: input, shape index: {}]
  %s8 = inlined_call_operand.vmem [shape: f32[1,32], index: 8, kind: input, shape index: {}, may-alias: {8,13}]
  %s9 = inlined_call_operand.hbm [shape: f32[64,128], index: 9, kind: input, shape index: {}]
  %s10 = inlined_call_operand.vmem [shape: f32[1,128], index: 10, kind: input, shape index: {}]
  %s11 = inlined_call_operand.vmem [shape: f32[8,1], index: 11, kind: output, shape index: {0}]
  %s12 = inlined_call_operand.hbm [shape: f32[1,32], index: 12, kind: output, shape index: {1}]
  %s13 = inlined_call_operand.vmem [shape: f32[1,32], index: 13, kind: output, shape index: {2}, may-alias: {8,13}]
  %14 = xla_tuple %s11, %s12, %s13
  %s15 = sld [smem:[#allocation0]]
  $region86: #{_arg_policy_fused.1} parent=0
    _
  %s17 = ssub.s32 1, %s15
  %s18 = scalar_select 0, %s17, %s15
  %v19 = vstv %s6
  %20 = vst [vmem:[#allocation2] sm:$0x1] %v19
  $region1: #{_arg_policy_fused.1} parent=0
    #allocation3 [shape = 'u8[557056]{0}', space=vmem, size = 0x88000, scoped, tag = 'input window, operand 1, single buffered']
    #allocation4 [shape = 's32[1]{0}', space=sflag, size = 0x4, scoped, tag = 'scoped memory for _arg_policy_fused.1']
    #allocation5 [shape = 's32[1]{0}', space=sflag, size = 0x4, scoped, tag = 'scoped memory for _arg_policy_fused.1']
    #allocation6 [shape = 'u8[1048576]{0}', space=vmem, size = 0x100000, scoped, tag = 'input window, operand 3, single buffered']
    #allocation7 [shape = 's32[1]{0}', space=sflag, size = 0x4, scoped, tag = 'scoped memory for _arg_policy_fused.1']
    #allocation8 [shape = 'u8[4096]{0}', space=vmem, size = 0x1000, scoped, tag = 'input window, operand 5, single buffered']
    #allocation9 [shape = 'u8[32768]{0}', space=vmem, size = 0x8000, scoped, tag = 'input window, operand 9, single buffered']
    #allocation10 [shape = 's32[1]{0}', space=sflag, size = 0x4, scoped, tag = 'scoped memory for _arg_policy_fused.1']
    #allocation11 [shape = 'u8[512]{0}', space=vmem, size = 0x400, scoped, tag = 'output window, operand 1, single buffered']
    %21 = vsyncpa [#allocation4], 0
    %22 = vsyncpa [#allocation7], 0
    %23 = vsyncpa [#allocation10], 0
    %24 = vsyncpa [#allocation5], 0
    // Predicated region
    $region2: #{_arg_policy_fused.1} parent=1 // pred_check
      _
    $region3: #{_arg_policy_fused.1} parent=1 // pred_check_branch
      %26 = sbr.rel (0) target = $region5
    $region4: #{_arg_policy_fused.1} parent=1 // pred_region
      _
    $region5: #{_arg_policy_fused.1} parent=1 // pred_fallthru
      _
    // Predicated region
    $region6: #{_arg_policy_fused.1} parent=1 // pred_check
      _
    $region7: #{_arg_policy_fused.1} parent=1 // pred_check_branch
      %28 = sbr.rel (0) target = $region9
    $region8: #{_arg_policy_fused.1} parent=1 // pred_region
      %s30 = ssub.s32 17408, 17408
      %31 = vsyncadd [#allocation4], %s30
      %s32 = sshll.u32 [#allocation3], 4
      %s33 = int_to_ptr.vmem [resolvable:$true] %s32
      %38 = dma.hbm_to_vmem [thread:$0]  %s1, 17408, %s33, [#allocation4], 256, 256, 16
    $region9: #{_arg_policy_fused.1} parent=1 // pred_fallthru
      _
    // Predicated region
    $region10: #{_arg_policy_fused.1} parent=1 // pred_check
      _
    $region11: #{_arg_policy_fused.1} parent=1 // pred_check_branch
      %40 = sbr.rel (0) target = $region13
    $region12: #{_arg_policy_fused.1} parent=1 // pred_region
      _
    $region13: #{_arg_policy_fused.1} parent=1 // pred_fallthru
      _
    // Predicated region
    $region14: #{_arg_policy_fused.1} parent=1 // pred_check
      _
    $region15: #{_arg_policy_fused.1} parent=1 // pred_check_branch
      %42 = sbr.rel (0) target = $region17
    $region16: #{_arg_policy_fused.1} parent=1 // pred_region
      %s44 = ssub.s32 32768, 32768
      %45 = vsyncadd [#allocation7], %s44
      %s46 = sshll.u32 [#allocation6], 4
      %s47 = int_to_ptr.vmem [resolvable:$true] %s46
      %52 = dma.hbm_to_vmem [thread:$0]  %s3, 32768, %s47, [#allocation7], 512, 512, 32
    $region17: #{_arg_policy_fused.1} parent=1 // pred_fallthru
      _
    // Predicated region
    $region18: #{_arg_policy_fused.1} parent=1 // pred_check
      _
    $region19: #{_arg_policy_fused.1} parent=1 // pred_check_branch
      %54 = sbr.rel (0) target = $region21
    $region20: #{_arg_policy_fused.1} parent=1 // pred_region
      _
    $region21: #{_arg_policy_fused.1} parent=1 // pred_fallthru
      _
    // Predicated region
    $region22: #{_arg_policy_fused.1} parent=1 // pred_check
      _
    $region23: #{_arg_policy_fused.1} parent=1 // pred_check_branch
      %56 = sbr.rel (0) target = $region25
    $region24: #{_arg_policy_fused.1} parent=1 // pred_region
      %s58 = ssub.s32 128, 128
      %59 = vsyncadd [#allocation7], %s58
      %s61 = sshll.u32 [#allocation8], 4
      %s62 = int_to_ptr.vmem [resolvable:$true] %s61
      %64 = dma.hbm_to_vmem [thread:$0]  %s5, 128, %s62, [#allocation7]
    $region25: #{_arg_policy_fused.1} parent=1 // pred_fallthru
      _
    // Predicated region
    $region26: #{_arg_policy_fused.1} parent=1 // pred_check
      _
    $region27: #{_arg_policy_fused.1} parent=1 // pred_check_branch
      %66 = sbr.rel (0) target = $region29
    $region28: #{_arg_policy_fused.1} parent=1 // pred_region
      _
    $region29: #{_arg_policy_fused.1} parent=1 // pred_fallthru
      _
    // Predicated region
    $region30: #{_arg_policy_fused.1} parent=1 // pred_check
      _
    $region31: #{_arg_policy_fused.1} parent=1 // pred_check_branch
      %68 = sbr.rel (0) target = $region33
    $region32: #{_arg_policy_fused.1} parent=1 // pred_region
      _
    $region33: #{_arg_policy_fused.1} parent=1 // pred_fallthru
      _
    // Predicated region
    $region34: #{_arg_policy_fused.1} parent=1 // pred_check
      _
    $region35: #{_arg_policy_fused.1} parent=1 // pred_check_branch
      %70 = sbr.rel (0) target = $region37
    $region36: #{_arg_policy_fused.1} parent=1 // pred_region
      _
    $region37: #{_arg_policy_fused.1} parent=1 // pred_fallthru
      _
    // Predicated region
    $region38: #{_arg_policy_fused.1} parent=1 // pred_check
      _
    $region39: #{_arg_policy_fused.1} parent=1 // pred_check_branch
      %72 = sbr.rel (0) target = $region41
    $region40: #{_arg_policy_fused.1} parent=1 // pred_region
      %s74 = ssub.s32 1024, 1024
      %75 = vsyncadd [#allocation10], %s74
      %s76 = sshll.u32 [#allocation9], 4
      %s77 = int_to_ptr.vmem [resolvable:$true] %s76
      %82 = dma.hbm_to_vmem [thread:$0]  %s9, 1024, %s77, [#allocation10], 128, 128, 8
    $region41: #{_arg_policy_fused.1} parent=1 // pred_fallthru
      _
    // Predicated region
    $region42: #{_arg_policy_fused.1} parent=1 // pred_check
      _
    $region43: #{_arg_policy_fused.1} parent=1 // pred_check_branch
      %84 = sbr.rel (0) target = $region45
    $region44: #{_arg_policy_fused.1} parent=1 // pred_region
      _
    $region45: #{_arg_policy_fused.1} parent=1 // pred_fallthru
      _
    // Predicated region
    $region46: #{_arg_policy_fused.1} parent=1 // pred_check
      _
    $region47: #{_arg_policy_fused.1} parent=1 // pred_check_branch
      %86 = sbr.rel (0) target = $region49
    $region48: #{_arg_policy_fused.1} parent=1 // pred_region
      %87 = dma.done [#allocation4], 17408
    $region49: #{_arg_policy_fused.1} parent=1 // pred_fallthru
      _
    // Predicated region
    $region50: #{_arg_policy_fused.1} parent=1 // pred_check
      _
    $region51: #{_arg_policy_fused.1} parent=1 // pred_check_branch
      %89 = sbr.rel (0) target = $region53
    $region52: #{_arg_policy_fused.1} parent=1 // pred_region
      %90 = dma.done [#allocation7], 32768
    $region53: #{_arg_policy_fused.1} parent=1 // pred_fallthru
      _
    // Predicated region
    $region54: #{_arg_policy_fused.1} parent=1 // pred_check
      _
    $region55: #{_arg_policy_fused.1} parent=1 // pred_check_branch
      %92 = sbr.rel (0) target = $region57
    $region56: #{_arg_policy_fused.1} parent=1 // pred_region
      %93 = dma.done [#allocation7], 128
    $region57: #{_arg_policy_fused.1} parent=1 // pred_fallthru
      _
    // Predicated region
    $region58: #{_arg_policy_fused.1} parent=1 // pred_check
      _
    $region59: #{_arg_policy_fused.1} parent=1 // pred_check_branch
      %95 = sbr.rel (0) target = $region61
    $region60: #{_arg_policy_fused.1} parent=1 // pred_region
      %96 = dma.done [#allocation10], 1024
    $region61: #{_arg_policy_fused.1} parent=1 // pred_fallthru
      _
    %v98 = vld [vmem:[%s0] sm:$0xff]
    %v99 = vld [vmem:[%s0 + $0x8] sm:$0xff]
    %v100 = vld [vmem:[%s0 + $0x10] sm:$0xff]
    %v101 = vld [vmem:[%s0 + $0x18] sm:$0xff]
    %v102 = vld [vmem:[%s0 + $0x20] sm:$0xff]
    %v103 = vpack.c.bf16 %v98, %v98
    %v104 = vpack.c.bf16 %v99, %v99
    %v105 = vpack.c.bf16 %v100, %v100
    %v106 = vpack.c.bf16 %v101, %v101
    %v107 = vpack.c.bf16 %v102, %v102
    %v108 = vld [vmem:[#allocation3] sm:$0xff]
    %v109 = vld [vmem:[#allocation3 + $0x8] sm:$0xff]
    %v110 = vld [vmem:[#allocation3 + $0x10] sm:$0xff]
    %v111 = vld [vmem:[#allocation3 + $0x18] sm:$0xff]
    %v112 = vld [vmem:[#allocation3 + $0x20] sm:$0xff]
    %v113 = vld [vmem:[#allocation3 + $0x28] sm:$0xff]
    %v114 = vld [vmem:[#allocation3 + $0x30] sm:$0xff]
    %v115 = vld [vmem:[#allocation3 + $0x38] sm:$0xff]
    %v116 = vld [vmem:[#allocation3 + $0x40] sm:$0xff]
    %v117 = vld [vmem:[#allocation3 + $0x48] sm:$0xff]
    %v118 = vld [vmem:[#allocation3 + $0x50] sm:$0xff]
    %v119 = vld [vmem:[#allocation3 + $0x58] sm:$0xff]
    %v120 = vld [vmem:[#allocation3 + $0x60] sm:$0xff]
    %v121 = vld [vmem:[#allocation3 + $0x68] sm:$0xff]
    %v122 = vld [vmem:[#allocation3 + $0x70] sm:$0xff]
    %v123 = vld [vmem:[#allocation3 + $0x78] sm:$0xff]
    %v124 = vld [vmem:[#allocation3 + $0x80] sm:$0xff]
    %v125 = vld [vmem:[#allocation3 + $0x88] sm:$0xff]
    %v126 = vld [vmem:[#allocation3 + $0x90] sm:$0xff]
    %v127 = vld [vmem:[#allocation3 + $0x98] sm:$0xff]
    %v128 = vld [vmem:[#allocation3 + $0xa0] sm:$0xff]
    %v129 = vld [vmem:[#allocation3 + $0xa8] sm:$0xff]
    %v130 = vld [vmem:[#allocation3 + $0xb0] sm:$0xff]
    %v131 = vld [vmem:[#allocation3 + $0xb8] sm:$0xff]
    %v132 = vld [vmem:[#allocation3 + $0xc0] sm:$0xff]
    %v133 = vld [vmem:[#allocation3 + $0xc8] sm:$0xff]
    %v134 = vld [vmem:[#allocation3 + $0xd0] sm:$0xff]
    %v135 = vld [vmem:[#allocation3 + $0xd8] sm:$0xff]
    %v136 = vld [vmem:[#allocation3 + $0xe0] sm:$0xff]
    %v137 = vld [vmem:[#allocation3 + $0xe8] sm:$0xff]
    %v138 = vld [vmem:[#allocation3 + $0xf0] sm:$0xff]
    %v139 = vld [vmem:[#allocation3 + $0xf8] sm:$0xff]
    %v140 = vld [vmem:[#allocation3 + $0x100] sm:$0xff]
    %v141 = vld [vmem:[#allocation3 + $0x108] sm:$0xff]
    %v142 = vld [vmem:[#allocation3 + $0x110] sm:$0xff]
    %v143 = vld [vmem:[#allocation3 + $0x118] sm:$0xff]
    %v144 = vld [vmem:[#allocation3 + $0x120] sm:$0xff]
    %v145 = vld [vmem:[#allocation3 + $0x128] sm:$0xff]
    %v146 = vld [vmem:[#allocation3 + $0x130] sm:$0xff]
    %v147 = vld [vmem:[#allocation3 + $0x138] sm:$0xff]
    %v148 = vld [vmem:[#allocation3 + $0x140] sm:$0xff]
    %v149 = vld [vmem:[#allocation3 + $0x148] sm:$0xff]
    %v150 = vld [vmem:[#allocation3 + $0x150] sm:$0xff]
    %v151 = vld [vmem:[#allocation3 + $0x158] sm:$0xff]
    %v152 = vld [vmem:[#allocation3 + $0x160] sm:$0xff]
    %v153 = vld [vmem:[#allocation3 + $0x168] sm:$0xff]
    %v154 = vld [vmem:[#allocation3 + $0x170] sm:$0xff]
    %v155 = vld [vmem:[#allocation3 + $0x178] sm:$0xff]
    %v156 = vld [vmem:[#allocation3 + $0x180] sm:$0xff]
    %v157 = vld [vmem:[#allocation3 + $0x188] sm:$0xff]
    %v158 = vld [vmem:[#allocation3 + $0x190] sm:$0xff]
    %v159 = vld [vmem:[#allocation3 + $0x198] sm:$0xff]
    %v160 = vld [vmem:[#allocation3 + $0x1a0] sm:$0xff]
    %v161 = vld [vmem:[#allocation3 + $0x1a8] sm:$0xff]
    %v162 = vld [vmem:[#allocation3 + $0x1b0] sm:$0xff]
    %v163 = vld [vmem:[#allocation3 + $0x1b8] sm:$0xff]
    %v164 = vld [vmem:[#allocation3 + $0x1c0] sm:$0xff]
    %v165 = vld [vmem:[#allocation3 + $0x1c8] sm:$0xff]
    %v166 = vld [vmem:[#allocation3 + $0x1d0] sm:$0xff]
    %v167 = vld [vmem:[#allocation3 + $0x1d8] sm:$0xff]
    %v168 = vld [vmem:[#allocation3 + $0x1e0] sm:$0xff]
    %v169 = vld [vmem:[#allocation3 + $0x1e8] sm:$0xff]
    %v170 = vld [vmem:[#allocation3 + $0x1f0] sm:$0xff]
    %v171 = vld [vmem:[#allocation3 + $0x1f8] sm:$0xff]
    %v172 = vld [vmem:[#allocation3 + $0x200] sm:$0xff]
    %v173 = vld [vmem:[#allocation3 + $0x208] sm:$0xff]
    %v174 = vld [vmem:[#allocation3 + $0x210] sm:$0xff]
    %v175 = vld [vmem:[#allocation3 + $0x218] sm:$0xff]
    %v176 = vld [vmem:[#allocation3 + $0x220] sm:$0xff]
    %v177 = vld [vmem:[#allocation3 + $0x228] sm:$0xff]
    %v178 = vld [vmem:[#allocation3 + $0x230] sm:$0xff]
    %v179 = vld [vmem:[#allocation3 + $0x238] sm:$0xff]
    %v180 = vld [vmem:[#allocation3 + $0x240] sm:$0xff]
    %v181 = vld [vmem:[#allocation3 + $0x248] sm:$0xff]
    %v182 = vld [vmem:[#allocation3 + $0x250] sm:$0xff]
    %v183 = vld [vmem:[#allocation3 + $0x258] sm:$0xff]
    %v184 = vld [vmem:[#allocation3 + $0x260] sm:$0xff]
    %v185 = vld [vmem:[#allocation3 + $0x268] sm:$0xff]
    %v186 = vld [vmem:[#allocation3 + $0x270] sm:$0xff]
    %v187 = vld [vmem:[#allocation3 + $0x278] sm:$0xff]
    %v188 = vld [vmem:[#allocation3 + $0x280] sm:$0xff]
    %v189 = vld [vmem:[#allocation3 + $0x288] sm:$0xff]
    %v190 = vld [vmem:[#allocation3 + $0x290] sm:$0xff]
    %v191 = vld [vmem:[#allocation3 + $0x298] sm:$0xff]
    %v192 = vld [vmem:[#allocation3 + $0x2a0] sm:$0xff]
    %v193 = vld [vmem:[#allocation3 + $0x2a8] sm:$0xff]
    %v194 = vld [vmem:[#allocation3 + $0x2b0] sm:$0xff]
    %v195 = vld [vmem:[#allocation3 + $0x2b8] sm:$0xff]
    %v196 = vld [vmem:[#allocation3 + $0x2c0] sm:$0xff]
    %v197 = vld [vmem:[#allocation3 + $0x2c8] sm:$0xff]
    %v198 = vld [vmem:[#allocation3 + $0x2d0] sm:$0xff]
    %v199 = vld [vmem:[#allocation3 + $0x2d8] sm:$0xff]
    %v200 = vld [vmem:[#allocation3 + $0x2e0] sm:$0xff]
    %v201 = vld [vmem:[#allocation3 + $0x2e8] sm:$0xff]
    %v202 = vld [vmem:[#allocation3 + $0x2f0] sm:$0xff]
    %v203 = vld [vmem:[#allocation3 + $0x2f8] sm:$0xff]
    %v204 = vld [vmem:[#allocation3 + $0x300] sm:$0xff]
    %v205 = vld [vmem:[#allocation3 + $0x308] sm:$0xff]
    %v206 = vld [vmem:[#allocation3 + $0x310] sm:$0xff]
    %v207 = vld [vmem:[#allocation3 + $0x318] sm:$0xff]
    %v208 = vld [vmem:[#allocation3 + $0x320] sm:$0xff]
    %v209 = vld [vmem:[#allocation3 + $0x328] sm:$0xff]
    %v210 = vld [vmem:[#allocation3 + $0x330] sm:$0xff]
    %v211 = vld [vmem:[#allocation3 + $0x338] sm:$0xff]
    %v212 = vld [vmem:[#allocation3 + $0x340] sm:$0xff]
    %v213 = vld [vmem:[#allocation3 + $0x348] sm:$0xff]
    %v214 = vld [vmem:[#allocation3 + $0x350] sm:$0xff]
    %v215 = vld [vmem:[#allocation3 + $0x358] sm:$0xff]
    %v216 = vld [vmem:[#allocation3 + $0x360] sm:$0xff]
    %v217 = vld [vmem:[#allocation3 + $0x368] sm:$0xff]
    %v218 = vld [vmem:[#allocation3 + $0x370] sm:$0xff]
    %v219 = vld [vmem:[#allocation3 + $0x378] sm:$0xff]
    %v220 = vld [vmem:[#allocation3 + $0x380] sm:$0xff]
    %v221 = vld [vmem:[#allocation3 + $0x388] sm:$0xff]
    %v222 = vld [vmem:[#allocation3 + $0x390] sm:$0xff]
    %v223 = vld [vmem:[#allocation3 + $0x398] sm:$0xff]
    %v224 = vld [vmem:[#allocation3 + $0x3a0] sm:$0xff]
    %v225 = vld [vmem:[#allocation3 + $0x3a8] sm:$0xff]
    %v226 = vld [vmem:[#allocation3 + $0x3b0] sm:$0xff]
    %v227 = vld [vmem:[#allocation3 + $0x3b8] sm:$0xff]
    %v228 = vld [vmem:[#allocation3 + $0x3c0] sm:$0xff]
    %v229 = vld [vmem:[#allocation3 + $0x3c8] sm:$0xff]
    %v230 = vld [vmem:[#allocation3 + $0x3d0] sm:$0xff]
    %v231 = vld [vmem:[#allocation3 + $0x3d8] sm:$0xff]
    %v232 = vld [vmem:[#allocation3 + $0x3e0] sm:$0xff]
    %v233 = vld [vmem:[#allocation3 + $0x3e8] sm:$0xff]
    %v234 = vld [vmem:[#allocation3 + $0x3f0] sm:$0xff]
    %v235 = vld [vmem:[#allocation3 + $0x3f8] sm:$0xff]
    %v236 = vld [vmem:[#allocation3 + $0x400] sm:$0xff]
    %v237 = vld [vmem:[#allocation3 + $0x408] sm:$0xff]
    %v238 = vld [vmem:[#allocation3 + $0x410] sm:$0xff]
    %v239 = vld [vmem:[#allocation3 + $0x418] sm:$0xff]
    %v240 = vld [vmem:[#allocation3 + $0x420] sm:$0xff]
    %v241 = vld [vmem:[#allocation3 + $0x428] sm:$0xff]
    %v242 = vld [vmem:[#allocation3 + $0x430] sm:$0xff]
    %v243 = vld [vmem:[#allocation3 + $0x438] sm:$0xff]
    %v244 = vld [vmem:[%s2] sm:$0xf]
    %v246 = vlaneseq
    %v247 = vshrl.u32 %v246, 7
    %v248 = vsub.s32 0, %v247
    %v249 = vrot.slane %v244, %v248
    %v250 = vlaneseq
    %v251 = vshrl.u32 %v250, 7
    %v252 = vsub.s32 1, %v251
    %v253 = vrot.slane %v244, %v252
    %v254 = vlaneseq
    %v255 = vshrl.u32 %v254, 7
    %v256 = vsub.s32 2, %v255
    %v257 = vrot.slane %v244, %v256
    %v258 = vlaneseq
    %v259 = vshrl.u32 %v258, 7
    %v260 = vsub.s32 3, %v259
    %v261 = vrot.slane %v244, %v260
    %v402 = vunpack.c.l.b16 %v108
    %v403 = vunpack.c.h.b16 %v108
    %v404 = vunpack.c.l.b16 %v109
    %v405 = vunpack.c.h.b16 %v109
    %v406 = vunpack.c.l.b16 %v110
    %v407 = vunpack.c.h.b16 %v110
    %v408 = vunpack.c.l.b16 %v111
    %v409 = vunpack.c.h.b16 %v111
    %v410 = vunpack.c.l.b16 %v112
    %v411 = vunpack.c.h.b16 %v112
    %v412 = vunpack.c.l.b16 %v113
    %v413 = vunpack.c.h.b16 %v113
    %v414 = vunpack.c.l.b16 %v114
    %v415 = vunpack.c.h.b16 %v114
    %v416 = vunpack.c.l.b16 %v115
    %v417 = vunpack.c.h.b16 %v115
    %v418 = vunpack.c.l.b16 %v116
    %v419 = vunpack.c.h.b16 %v116
    %v420 = vunpack.c.l.b16 %v117
    %v421 = vunpack.c.h.b16 %v117
    %v422 = vunpack.c.l.b16 %v118
    %v423 = vunpack.c.h.b16 %v118
    %v424 = vunpack.c.l.b16 %v119
    %v425 = vunpack.c.h.b16 %v119
    %v426 = vunpack.c.l.b16 %v120
    %v427 = vunpack.c.h.b16 %v120
    %v428 = vunpack.c.l.b16 %v121
    %v429 = vunpack.c.h.b16 %v121
    %v430 = vunpack.c.l.b16 %v122
    %v431 = vunpack.c.h.b16 %v122
    %v432 = vunpack.c.l.b16 %v123
    %v433 = vunpack.c.h.b16 %v123
    %v434 = vunpack.c.l.b16 %v124
    %v435 = vunpack.c.h.b16 %v124
    %v436 = vunpack.c.l.b16 %v125
    %v437 = vunpack.c.h.b16 %v125
    %v438 = vunpack.c.l.b16 %v126
    %v439 = vunpack.c.h.b16 %v126
    %v440 = vunpack.c.l.b16 %v127
    %v441 = vunpack.c.h.b16 %v127
    %v442 = vunpack.c.l.b16 %v128
    %v443 = vunpack.c.h.b16 %v128
    %v444 = vunpack.c.l.b16 %v129
    %v445 = vunpack.c.h.b16 %v129
    %v446 = vunpack.c.l.b16 %v130
    %v447 = vunpack.c.h.b16 %v130
    %v448 = vunpack.c.l.b16 %v131
    %v449 = vunpack.c.h.b16 %v131
    %v450 = vunpack.c.l.b16 %v132
    %v451 = vunpack.c.h.b16 %v132
    %v452 = vunpack.c.l.b16 %v133
    %v453 = vunpack.c.h.b16 %v133
    %v454 = vunpack.c.l.b16 %v134
    %v455 = vunpack.c.h.b16 %v134
    %v456 = vunpack.c.l.b16 %v135
    %v457 = vunpack.c.h.b16 %v135
    %v458 = vunpack.c.l.b16 %v136
    %v459 = vunpack.c.h.b16 %v136
    %v460 = vunpack.c.l.b16 %v137
    %v461 = vunpack.c.h.b16 %v137
    %v462 = vunpack.c.l.b16 %v138
    %v463 = vunpack.c.h.b16 %v138
    %v464 = vunpack.c.l.b16 %v139
    %v465 = vunpack.c.h.b16 %v139
    %v466 = vunpack.c.l.b16 %v140
    %v467 = vunpack.c.h.b16 %v140
    %v468 = vunpack.c.l.b16 %v141
    %v469 = vunpack.c.h.b16 %v141
    %v470 = vunpack.c.l.b16 %v142
    %v471 = vunpack.c.h.b16 %v142
    %v472 = vunpack.c.l.b16 %v143
    %v473 = vunpack.c.h.b16 %v143
    %v474 = vunpack.c.l.b16 %v144
    %v475 = vunpack.c.h.b16 %v144
    %v476 = vunpack.c.l.b16 %v145
    %v477 = vunpack.c.h.b16 %v145
    %v478 = vunpack.c.l.b16 %v146
    %v479 = vunpack.c.h.b16 %v146
    %v480 = vunpack.c.l.b16 %v147
    %v481 = vunpack.c.h.b16 %v147
    %v482 = vunpack.c.l.b16 %v148
    %v483 = vunpack.c.h.b16 %v148
    %v484 = vunpack.c.l.b16 %v149
    %v485 = vunpack.c.h.b16 %v149
    %v486 = vunpack.c.l.b16 %v150
    %v487 = vunpack.c.h.b16 %v150
    %v488 = vunpack.c.l.b16 %v151
    %v489 = vunpack.c.h.b16 %v151
    %v490 = vunpack.c.l.b16 %v152
    %v491 = vunpack.c.h.b16 %v152
    %v492 = vunpack.c.l.b16 %v153
    %v493 = vunpack.c.h.b16 %v153
    %v494 = vunpack.c.l.b16 %v154
    %v495 = vunpack.c.h.b16 %v154
    %v496 = vunpack.c.l.b16 %v155
    %v497 = vunpack.c.h.b16 %v155
    %v498 = vunpack.c.l.b16 %v156
    %v499 = vunpack.c.h.b16 %v156
    %v500 = vunpack.c.l.b16 %v157
    %v501 = vunpack.c.h.b16 %v157
    %v502 = vunpack.c.l.b16 %v158
    %v503 = vunpack.c.h.b16 %v158
    %v504 = vunpack.c.l.b16 %v159
    %v505 = vunpack.c.h.b16 %v159
    %v506 = vunpack.c.l.b16 %v160
    %v507 = vunpack.c.h.b16 %v160
    %v508 = vunpack.c.l.b16 %v161
    %v509 = vunpack.c.h.b16 %v161
    %v510 = vunpack.c.l.b16 %v162
    %v511 = vunpack.c.h.b16 %v162
    %v512 = vunpack.c.l.b16 %v163
    %v513 = vunpack.c.h.b16 %v163
    %v514 = vunpack.c.l.b16 %v164
    %v515 = vunpack.c.h.b16 %v164
    %v516 = vunpack.c.l.b16 %v165
    %v517 = vunpack.c.h.b16 %v165
    %v518 = vunpack.c.l.b16 %v166
    %v519 = vunpack.c.h.b16 %v166
    %v520 = vunpack.c.l.b16 %v167
    %v521 = vunpack.c.h.b16 %v167
    %v522 = vunpack.c.l.b16 %v168
    %v523 = vunpack.c.h.b16 %v168
    %v524 = vunpack.c.l.b16 %v169
    %v525 = vunpack.c.h.b16 %v169
    %v526 = vunpack.c.l.b16 %v170
    %v527 = vunpack.c.h.b16 %v170
    %v528 = vunpack.c.l.b16 %v171
    %v529 = vunpack.c.h.b16 %v171
    %v530 = vunpack.c.l.b16 %v172
    %v531 = vunpack.c.h.b16 %v172
    %v532 = vunpack.c.l.b16 %v173
    %v533 = vunpack.c.h.b16 %v173
    %v534 = vunpack.c.l.b16 %v174
    %v535 = vunpack.c.h.b16 %v174
    %v536 = vunpack.c.l.b16 %v175
    %v537 = vunpack.c.h.b16 %v175
    %v538 = vunpack.c.l.b16 %v176
    %v539 = vunpack.c.h.b16 %v176
    %v540 = vunpack.c.l.b16 %v177
    %v541 = vunpack.c.h.b16 %v177
    %v542 = vunpack.c.l.b16 %v178
    %v543 = vunpack.c.h.b16 %v178
    %v544 = vunpack.c.l.b16 %v179
    %v545 = vunpack.c.h.b16 %v179
    %v546 = vunpack.c.l.b16 %v180
    %v547 = vunpack.c.h.b16 %v180
    %v548 = vunpack.c.l.b16 %v181
    %v549 = vunpack.c.h.b16 %v181
    %v550 = vunpack.c.l.b16 %v182
    %v551 = vunpack.c.h.b16 %v182
    %v552 = vunpack.c.l.b16 %v183
    %v553 = vunpack.c.h.b16 %v183
    %v554 = vunpack.c.l.b16 %v184
    %v555 = vunpack.c.h.b16 %v184
    %v556 = vunpack.c.l.b16 %v185
    %v557 = vunpack.c.h.b16 %v185
    %v558 = vunpack.c.l.b16 %v186
    %v559 = vunpack.c.h.b16 %v186
    %v560 = vunpack.c.l.b16 %v187
    %v561 = vunpack.c.h.b16 %v187
    %v562 = vunpack.c.l.b16 %v188
    %v563 = vunpack.c.h.b16 %v188
    %v564 = vunpack.c.l.b16 %v189
    %v565 = vunpack.c.h.b16 %v189
    %v566 = vunpack.c.l.b16 %v190
    %v567 = vunpack.c.h.b16 %v190
    %v568 = vunpack.c.l.b16 %v191
    %v569 = vunpack.c.h.b16 %v191
    %v570 = vunpack.c.l.b16 %v192
    %v571 = vunpack.c.h.b16 %v192
    %v572 = vunpack.c.l.b16 %v193
    %v573 = vunpack.c.h.b16 %v193
    %v574 = vunpack.c.l.b16 %v194
    %v575 = vunpack.c.h.b16 %v194
    %v576 = vunpack.c.l.b16 %v195
    %v577 = vunpack.c.h.b16 %v195
    %v578 = vunpack.c.l.b16 %v196
    %v579 = vunpack.c.h.b16 %v196
    %v580 = vunpack.c.l.b16 %v197
    %v581 = vunpack.c.h.b16 %v197
    %v582 = vunpack.c.l.b16 %v198
    %v583 = vunpack.c.h.b16 %v198
    %v584 = vunpack.c.l.b16 %v199
    %v585 = vunpack.c.h.b16 %v199
    %v586 = vunpack.c.l.b16 %v200
    %v587 = vunpack.c.h.b16 %v200
    %v588 = vunpack.c.l.b16 %v201
    %v589 = vunpack.c.h.b16 %v201
    %v590 = vunpack.c.l.b16 %v202
    %v591 = vunpack.c.h.b16 %v202
    %v592 = vunpack.c.l.b16 %v203
    %v593 = vunpack.c.h.b16 %v203
    %v594 = vunpack.c.l.b16 %v204
    %v595 = vunpack.c.h.b16 %v204
    %v596 = vunpack.c.l.b16 %v205
    %v597 = vunpack.c.h.b16 %v205
    %v598 = vunpack.c.l.b16 %v206
    %v599 = vunpack.c.h.b16 %v206
    %v600 = vunpack.c.l.b16 %v207
    %v601 = vunpack.c.h.b16 %v207
    %v602 = vunpack.c.l.b16 %v208
    %v603 = vunpack.c.h.b16 %v208
    %v604 = vunpack.c.l.b16 %v209
    %v605 = vunpack.c.h.b16 %v209
    %v606 = vunpack.c.l.b16 %v210
    %v607 = vunpack.c.h.b16 %v210
    %v608 = vunpack.c.l.b16 %v211
    %v609 = vunpack.c.h.b16 %v211
    %v610 = vunpack.c.l.b16 %v212
    %v611 = vunpack.c.h.b16 %v212
    %v612 = vunpack.c.l.b16 %v213
    %v613 = vunpack.c.h.b16 %v213
    %v614 = vunpack.c.l.b16 %v214
    %v615 = vunpack.c.h.b16 %v214
    %v616 = vunpack.c.l.b16 %v215
    %v617 = vunpack.c.h.b16 %v215
    %v618 = vunpack.c.l.b16 %v216
    %v619 = vunpack.c.h.b16 %v216
    %v620 = vunpack.c.l.b16 %v217
    %v621 = vunpack.c.h.b16 %v217
    %v622 = vunpack.c.l.b16 %v218
    %v623 = vunpack.c.h.b16 %v218
    %v624 = vunpack.c.l.b16 %v219
    %v625 = vunpack.c.h.b16 %v219
    %v626 = vunpack.c.l.b16 %v220
    %v627 = vunpack.c.h.b16 %v220
    %v628 = vunpack.c.l.b16 %v221
    %v629 = vunpack.c.h.b16 %v221
    %v630 = vunpack.c.l.b16 %v222
    %v631 = vunpack.c.h.b16 %v222
    %v632 = vunpack.c.l.b16 %v223
    %v633 = vunpack.c.h.b16 %v223
    %v634 = vunpack.c.l.b16 %v224
    %v635 = vunpack.c.h.b16 %v224
    %v636 = vunpack.c.l.b16 %v225
    %v637 = vunpack.c.h.b16 %v225
    %v638 = vunpack.c.l.b16 %v226
    %v639 = vunpack.c.h.b16 %v226
    %v640 = vunpack.c.l.b16 %v227
    %v641 = vunpack.c.h.b16 %v227
    %v642 = vunpack.c.l.b16 %v228
    %v643 = vunpack.c.h.b16 %v228
    %v644 = vunpack.c.l.b16 %v229
    %v645 = vunpack.c.h.b16 %v229
    %v646 = vunpack.c.l.b16 %v230
    %v647 = vunpack.c.h.b16 %v230
    %v648 = vunpack.c.l.b16 %v231
    %v649 = vunpack.c.h.b16 %v231
    %v650 = vunpack.c.l.b16 %v232
    %v651 = vunpack.c.h.b16 %v232
    %v652 = vunpack.c.l.b16 %v233
    %v653 = vunpack.c.h.b16 %v233
    %v654 = vunpack.c.l.b16 %v234
    %v655 = vunpack.c.h.b16 %v234
    %v656 = vunpack.c.l.b16 %v235
    %v657 = vunpack.c.h.b16 %v235
    %v658 = vunpack.c.l.b16 %v236
    %v659 = vunpack.c.h.b16 %v236
    %v660 = vunpack.c.l.b16 %v237
    %v661 = vunpack.c.h.b16 %v237
    %v662 = vunpack.c.l.b16 %v238
    %v663 = vunpack.c.h.b16 %v238
    %v664 = vunpack.c.l.b16 %v239
    %v665 = vunpack.c.h.b16 %v239
    %v666 = vunpack.c.l.b16 %v240
    %v667 = vunpack.c.h.b16 %v240
    %v668 = vunpack.c.l.b16 %v241
    %v669 = vunpack.c.h.b16 %v241
    %v670 = vunpack.c.l.b16 %v242
    %v671 = vunpack.c.h.b16 %v242
    %v672 = vunpack.c.l.b16 %v243
    %v673 = vunpack.c.h.b16 %v243
    %v674 = vpack.c.b16 %v406, %v402
    %v675 = vpack.c.b16 %v407, %v403
    %v676 = vpack.c.b16 %v408, %v404
    %v677 = vpack.c.b16 %v409, %v405
    %v678 = vpack.c.b16 %v414, %v410
    %v679 = vpack.c.b16 %v415, %v411
    %v680 = vpack.c.b16 %v416, %v412
    %v681 = vpack.c.b16 %v417, %v413
    %v682 = vpack.c.b16 %v422, %v418
    %v683 = vpack.c.b16 %v423, %v419
    %v684 = vpack.c.b16 %v424, %v420
    %v685 = vpack.c.b16 %v425, %v421
    %v686 = vpack.c.b16 %v430, %v426
    %v687 = vpack.c.b16 %v431, %v427
    %v688 = vpack.c.b16 %v432, %v428
    %v689 = vpack.c.b16 %v433, %v429
    %v690 = vpack.c.b16 %v438, %v434
    %v691 = vpack.c.b16 %v439, %v435
    %v692 = vpack.c.b16 %v440, %v436
    %v693 = vpack.c.b16 %v441, %v437
    %v694 = vpack.c.b16 %v446, %v442
    %v695 = vpack.c.b16 %v447, %v443
    %v696 = vpack.c.b16 %v448, %v444
    %v697 = vpack.c.b16 %v449, %v445
    %v698 = vpack.c.b16 %v454, %v450
    %v699 = vpack.c.b16 %v455, %v451
    %v700 = vpack.c.b16 %v456, %v452
    %v701 = vpack.c.b16 %v457, %v453
    %v702 = vpack.c.b16 %v462, %v458
    %v703 = vpack.c.b16 %v463, %v459
    %v704 = vpack.c.b16 %v464, %v460
    %v705 = vpack.c.b16 %v465, %v461
    %v706 = vpack.c.b16 %v470, %v466
    %v707 = vpack.c.b16 %v471, %v467
    %v708 = vpack.c.b16 %v472, %v468
    %v709 = vpack.c.b16 %v473, %v469
    %v710 = vpack.c.b16 %v478, %v474
    %v711 = vpack.c.b16 %v479, %v475
    %v712 = vpack.c.b16 %v480, %v476
    %v713 = vpack.c.b16 %v481, %v477
    %v714 = vpack.c.b16 %v486, %v482
    %v715 = vpack.c.b16 %v487, %v483
    %v716 = vpack.c.b16 %v488, %v484
    %v717 = vpack.c.b16 %v489, %v485
    %v718 = vpack.c.b16 %v494, %v490
    %v719 = vpack.c.b16 %v495, %v491
    %v720 = vpack.c.b16 %v496, %v492
    %v721 = vpack.c.b16 %v497, %v493
    %v722 = vpack.c.b16 %v502, %v498
    %v723 = vpack.c.b16 %v503, %v499
    %v724 = vpack.c.b16 %v504, %v500
    %v725 = vpack.c.b16 %v505, %v501
    %v726 = vpack.c.b16 %v510, %v506
    %v727 = vpack.c.b16 %v511, %v507
    %v728 = vpack.c.b16 %v512, %v508
    %v729 = vpack.c.b16 %v513, %v509
    %v730 = vpack.c.b16 %v518, %v514
    %v731 = vpack.c.b16 %v519, %v515
    %v732 = vpack.c.b16 %v520, %v516
    %v733 = vpack.c.b16 %v521, %v517
    %v734 = vpack.c.b16 %v526, %v522
    %v735 = vpack.c.b16 %v527, %v523
    %v736 = vpack.c.b16 %v528, %v524
    %v737 = vpack.c.b16 %v529, %v525
    %v738 = vpack.c.b16 %v534, %v530
    %v739 = vpack.c.b16 %v535, %v531
    %v740 = vpack.c.b16 %v536, %v532
    %v741 = vpack.c.b16 %v537, %v533
    %v742 = vpack.c.b16 %v542, %v538
    %v743 = vpack.c.b16 %v543, %v539
    %v744 = vpack.c.b16 %v544, %v540
    %v745 = vpack.c.b16 %v545, %v541
    %v746 = vpack.c.b16 %v550, %v546
    %v747 = vpack.c.b16 %v551, %v547
    %v748 = vpack.c.b16 %v552, %v548
    %v749 = vpack.c.b16 %v553, %v549
    %v750 = vpack.c.b16 %v558, %v554
    %v751 = vpack.c.b16 %v559, %v555
    %v752 = vpack.c.b16 %v560, %v556
    %v753 = vpack.c.b16 %v561, %v557
    %v754 = vpack.c.b16 %v566, %v562
    %v755 = vpack.c.b16 %v567, %v563
    %v756 = vpack.c.b16 %v568, %v564
    %v757 = vpack.c.b16 %v569, %v565
    %v758 = vpack.c.b16 %v574, %v570
    %v759 = vpack.c.b16 %v575, %v571
    %v760 = vpack.c.b16 %v576, %v572
    %v761 = vpack.c.b16 %v577, %v573
    %v762 = vpack.c.b16 %v582, %v578
    %v763 = vpack.c.b16 %v583, %v579
    %v764 = vpack.c.b16 %v584, %v580
    %v765 = vpack.c.b16 %v585, %v581
    %v766 = vpack.c.b16 %v590, %v586
    %v767 = vpack.c.b16 %v591, %v587
    %v768 = vpack.c.b16 %v592, %v588
    %v769 = vpack.c.b16 %v593, %v589
    %v770 = vpack.c.b16 %v598, %v594
    %v771 = vpack.c.b16 %v599, %v595
    %v772 = vpack.c.b16 %v600, %v596
    %v773 = vpack.c.b16 %v601, %v597
    %v774 = vpack.c.b16 %v606, %v602
    %v775 = vpack.c.b16 %v607, %v603
    %v776 = vpack.c.b16 %v608, %v604
    %v777 = vpack.c.b16 %v609, %v605
    %v778 = vpack.c.b16 %v614, %v610
    %v779 = vpack.c.b16 %v615, %v611
    %v780 = vpack.c.b16 %v616, %v612
    %v781 = vpack.c.b16 %v617, %v613
    %v782 = vpack.c.b16 %v622, %v618
    %v783 = vpack.c.b16 %v623, %v619
    %v784 = vpack.c.b16 %v624, %v620
    %v785 = vpack.c.b16 %v625, %v621
    %v786 = vpack.c.b16 %v630, %v626
    %v787 = vpack.c.b16 %v631, %v627
    %v788 = vpack.c.b16 %v632, %v628
    %v789 = vpack.c.b16 %v633, %v629
    %v790 = vpack.c.b16 %v638, %v634
    %v791 = vpack.c.b16 %v639, %v635
    %v792 = vpack.c.b16 %v640, %v636
    %v793 = vpack.c.b16 %v641, %v637
    %v794 = vpack.c.b16 %v646, %v642
    %v795 = vpack.c.b16 %v647, %v643
    %v796 = vpack.c.b16 %v648, %v644
    %v797 = vpack.c.b16 %v649, %v645
    %v798 = vpack.c.b16 %v654, %v650
    %v799 = vpack.c.b16 %v655, %v651
    %v800 = vpack.c.b16 %v656, %v652
    %v801 = vpack.c.b16 %v657, %v653
    %v802 = vpack.c.b16 %v662, %v658
    %v803 = vpack.c.b16 %v663, %v659
    %v804 = vpack.c.b16 %v664, %v660
    %v805 = vpack.c.b16 %v665, %v661
    %v806 = vpack.c.b16 %v670, %v666
    %v807 = vpack.c.b16 %v671, %v667
    %v808 = vpack.c.b16 %v672, %v668
    %v809 = vpack.c.b16 %v673, %v669
    %vm946 = vcmask 261120
    %v948 = vsel %vm946, %v107, 0
    %950 = vmatprep.subr.bf16.mxu0 %v675
    %951 = vmatpush1.bf16.msra.mxu0 %v674
    %952 = vmatprep.subr.bf16.mxu0 %v679
    %953 = vmatpush1.bf16.msra.mxu0 %v678
    %954 = vmatprep.subr.bf16.mxu0 %v683
    %955 = vmatpush1.bf16.msra.mxu0 %v682
    %956 = vmatprep.subr.bf16.mxu0 %v687
    %957 = vmatpush1.bf16.msra.mxu0 %v686
    %958 = vmatprep.subr.bf16.mxu0 %v691
    %959 = vmatpush1.bf16.msra.mxu0 %v690
    %960 = vmatprep.subr.bf16.mxu0 %v695
    %961 = vmatpush1.bf16.msra.mxu0 %v694
    %962 = vmatprep.subr.bf16.mxu0 %v699
    %963 = vmatpush1.bf16.msra.mxu0 %v698
    %964 = vmatprep.subr.bf16.mxu0 %v703
    %965 = vmatpush1.bf16.msra.mxu0 %v702
    %966 = vmatprep.subr.bf16.mxu0 %v707
    %967 = vmatpush1.bf16.msra.mxu0 %v706
    %968 = vmatprep.subr.bf16.mxu0 %v711
    %969 = vmatpush1.bf16.msra.mxu0 %v710
    %970 = vmatprep.subr.bf16.mxu0 %v715
    %971 = vmatpush1.bf16.msra.mxu0 %v714
    %972 = vmatprep.subr.bf16.mxu0 %v719
    %973 = vmatpush1.bf16.msra.mxu0 %v718
    %974 = vmatprep.subr.bf16.mxu0 %v723
    %975 = vmatpush1.bf16.msra.mxu0 %v722
    %976 = vmatprep.subr.bf16.mxu0 %v727
    %977 = vmatpush1.bf16.msra.mxu0 %v726
    %978 = vmatprep.subr.bf16.mxu0 %v731
    %979 = vmatpush1.bf16.msra.mxu0 %v730
    %980 = vmatprep.subr.bf16.mxu0 %v735
    %981 = vmatpush1.bf16.msra.mxu0 %v734
    %982 = vmatprep.mubr.bf16.mxu0 %v104
    %983 = vmatmul.mubr.bf16.gmra.mrb[0].mxu0 %v103
    %v984 = vpop.f32.mrb[0].mxu0
    %v985 = vadd.f32 %v249, %v984
    %v986 = vpop.f32.mrb[0].mxu0
    %v987 = vadd.f32 %v253, %v986
    %v988 = vpop.f32.mrb[0].mxu0
    %v989 = vpop.f32.mrb[0].mxu0
    %990 = vdwg.mxu0
    %991 = vmatprep.subr.bf16.mxu0 %v739
    %992 = vmatpush1.bf16.msra.mxu0 %v738
    %993 = vmatprep.subr.bf16.mxu0 %v743
    %994 = vmatpush1.bf16.msra.mxu0 %v742
    %995 = vmatprep.subr.bf16.mxu0 %v747
    %996 = vmatpush1.bf16.msra.mxu0 %v746
    %997 = vmatprep.subr.bf16.mxu0 %v751
    %998 = vmatpush1.bf16.msra.mxu0 %v750
    %999 = vmatprep.subr.bf16.mxu0 %v755
    %1000 = vmatpush1.bf16.msra.mxu0 %v754
    %1001 = vmatprep.subr.bf16.mxu0 %v759
    %1002 = vmatpush1.bf16.msra.mxu0 %v758
    %1003 = vmatprep.subr.bf16.mxu0 %v763
    %1004 = vmatpush1.bf16.msra.mxu0 %v762
    %1005 = vmatprep.subr.bf16.mxu0 %v767
    %1006 = vmatpush1.bf16.msra.mxu0 %v766
    %1007 = vmatprep.subr.bf16.mxu0 %v771
    %1008 = vmatpush1.bf16.msra.mxu0 %v770
    %1009 = vmatprep.subr.bf16.mxu0 %v775
    %1010 = vmatpush1.bf16.msra.mxu0 %v774
    %1011 = vmatprep.subr.bf16.mxu0 %v779
    %1012 = vmatpush1.bf16.msra.mxu0 %v778
    %1013 = vmatprep.subr.bf16.mxu0 %v783
    %1014 = vmatpush1.bf16.msra.mxu0 %v782
    %1015 = vmatprep.subr.bf16.mxu0 %v787
    %1016 = vmatpush1.bf16.msra.mxu0 %v786
    %1017 = vmatprep.subr.bf16.mxu0 %v791
    %1018 = vmatpush1.bf16.msra.mxu0 %v790
    %1019 = vmatprep.subr.bf16.mxu0 %v795
    %1020 = vmatpush1.bf16.msra.mxu0 %v794
    %1021 = vmatprep.subr.bf16.mxu0 %v799
    %1022 = vmatpush1.bf16.msra.mxu0 %v798
    %1023 = vmatprep.mubr.bf16.mxu0 %v106
    %1024 = vmatmul.mubr.bf16.gmra.mrb[0].mxu0 %v105
    %v1025 = vpop.f32.mrb[0].mxu0
    %v1026 = vadd.f32 %v985, %v1025
    %v1027 = vpop.f32.mrb[0].mxu0
    %v1028 = vadd.f32 %v987, %v1027
    %v1029 = vpop.f32.mrb[0].mxu0
    %v1030 = vpop.f32.mrb[0].mxu0
    %1031 = vdwg.mxu0
    %1032 = vmatprep.subr.bf16.mxu0 %v803
    %1033 = vmatpush1.bf16.msra.mxu0 %v802
    %1034 = vmatprep.subr.bf16.mxu0 %v807
    %1035 = vmatpush1.bf16.msra.mxu0 %v806
    %1036 = vmatprep.subr.bf16.mxu0 0
    %1037 = vmatpush1.bf16.msra.mxu0 0
    %1038 = vmatprep.subr.bf16.mxu0 0
    %1039 = vmatpush1.bf16.msra.mxu0 0
    %1040 = vmatprep.subr.bf16.mxu0 0
    %1041 = vmatpush1.bf16.msra.mxu0 0
    %1042 = vmatprep.subr.bf16.mxu0 0
    %1043 = vmatpush1.bf16.msra.mxu0 0
    %1044 = vmatprep.subr.bf16.mxu0 0
    %1045 = vmatpush1.bf16.msra.mxu0 0
    %1046 = vmatprep.subr.bf16.mxu0 0
    %1047 = vmatpush1.bf16.msra.mxu0 0
    %1048 = vmatprep.subr.bf16.mxu0 0
    %1049 = vmatpush1.bf16.msra.mxu0 0
    %1050 = vmatprep.subr.bf16.mxu0 0
    %1051 = vmatpush1.bf16.msra.mxu0 0
    %1052 = vmatprep.subr.bf16.mxu0 0
    %1053 = vmatpush1.bf16.msra.mxu0 0
    %1054 = vmatprep.subr.bf16.mxu0 0
    %1055 = vmatpush1.bf16.msra.mxu0 0
    %1056 = vmatprep.subr.bf16.mxu0 0
    %1057 = vmatpush1.bf16.msra.mxu0 0
    %1058 = vmatprep.subr.bf16.mxu0 0
    %1059 = vmatpush1.bf16.msra.mxu0 0
    %1060 = vmatprep.subr.bf16.mxu0 0
    %1061 = vmatpush1.bf16.msra.mxu0 0
    %1062 = vmatprep.subr.bf16.mxu0 0
    %1063 = vmatpush1.bf16.msra.mxu0 0
    %1064 = vmatprep.mubr.bf16.mxu0 0
    %1065 = vmatmul.mubr.bf16.gmra.mrb[0].mxu0 %v948
    %v1066 = vpop.f32.mrb[0].mxu0
    %v1067 = vadd.f32 %v1026, %v1066
    %v1068 = vpop.f32.mrb[0].mxu0
    %v1069 = vadd.f32 %v1028, %v1068
    %v1070 = vpop.f32.mrb[0].mxu0
    %v1071 = vpop.f32.mrb[0].mxu0
    %1072 = vdwg.mxu0
    %1073 = vmatprep.subr.bf16.mxu0 %v677
    %1074 = vmatpush1.bf16.msra.mxu0 %v676
    %1075 = vmatprep.subr.bf16.mxu0 %v681
    %1076 = vmatpush1.bf16.msra.mxu0 %v680
    %1077 = vmatprep.subr.bf16.mxu0 %v685
    %1078 = vmatpush1.bf16.msra.mxu0 %v684
    %1079 = vmatprep.subr.bf16.mxu0 %v689
    %1080 = vmatpush1.bf16.msra.mxu0 %v688
    %1081 = vmatprep.subr.bf16.mxu0 %v693
    %1082 = vmatpush1.bf16.msra.mxu0 %v692
    %1083 = vmatprep.subr.bf16.mxu0 %v697
    %1084 = vmatpush1.bf16.msra.mxu0 %v696
    %1085 = vmatprep.subr.bf16.mxu0 %v701
    %1086 = vmatpush1.bf16.msra.mxu0 %v700
    %1087 = vmatprep.subr.bf16.mxu0 %v705
    %1088 = vmatpush1.bf16.msra.mxu0 %v704
    %1089 = vmatprep.subr.bf16.mxu0 %v709
    %1090 = vmatpush1.bf16.msra.mxu0 %v708
    %1091 = vmatprep.subr.bf16.mxu0 %v713
    %1092 = vmatpush1.bf16.msra.mxu0 %v712
    %1093 = vmatprep.subr.bf16.mxu0 %v717
    %1094 = vmatpush1.bf16.msra.mxu0 %v716
    %1095 = vmatprep.subr.bf16.mxu0 %v721
    %1096 = vmatpush1.bf16.msra.mxu0 %v720
    %1097 = vmatprep.subr.bf16.mxu0 %v725
    %1098 = vmatpush1.bf16.msra.mxu0 %v724
    %1099 = vmatprep.subr.bf16.mxu0 %v729
    %1100 = vmatpush1.bf16.msra.mxu0 %v728
    %1101 = vmatprep.subr.bf16.mxu0 %v733
    %1102 = vmatpush1.bf16.msra.mxu0 %v732
    %1103 = vmatprep.subr.bf16.mxu0 %v737
    %1104 = vmatpush1.bf16.msra.mxu0 %v736
    %1105 = vmatprep.mubr.bf16.mxu0 %v104
    %1106 = vmatmul.mubr.bf16.gmra.mrb[0].mxu0 %v103
    %v1107 = vpop.f32.mrb[0].mxu0
    %v1108 = vadd.f32 %v257, %v1107
    %v1109 = vpop.f32.mrb[0].mxu0
    %v1110 = vadd.f32 %v261, %v1109
    %v1111 = vpop.f32.mrb[0].mxu0
    %v1112 = vpop.f32.mrb[0].mxu0
    %1113 = vdwg.mxu0
    %1114 = vmatprep.subr.bf16.mxu0 %v741
    %1115 = vmatpush1.bf16.msra.mxu0 %v740
    %1116 = vmatprep.subr.bf16.mxu0 %v745
    %1117 = vmatpush1.bf16.msra.mxu0 %v744
    %1118 = vmatprep.subr.bf16.mxu0 %v749
    %1119 = vmatpush1.bf16.msra.mxu0 %v748
    %1120 = vmatprep.subr.bf16.mxu0 %v753
    %1121 = vmatpush1.bf16.msra.mxu0 %v752
    %1122 = vmatprep.subr.bf16.mxu0 %v757
    %1123 = vmatpush1.bf16.msra.mxu0 %v756
    %1124 = vmatprep.subr.bf16.mxu0 %v761
    %1125 = vmatpush1.bf16.msra.mxu0 %v760
    %1126 = vmatprep.subr.bf16.mxu0 %v765
    %1127 = vmatpush1.bf16.msra.mxu0 %v764
    %1128 = vmatprep.subr.bf16.mxu0 %v769
    %1129 = vmatpush1.bf16.msra.mxu0 %v768
    %1130 = vmatprep.subr.bf16.mxu0 %v773
    %1131 = vmatpush1.bf16.msra.mxu0 %v772
    %1132 = vmatprep.subr.bf16.mxu0 %v777
    %1133 = vmatpush1.bf16.msra.mxu0 %v776
    %1134 = vmatprep.subr.bf16.mxu0 %v781
    %1135 = vmatpush1.bf16.msra.mxu0 %v780
    %1136 = vmatprep.subr.bf16.mxu0 %v785
    %1137 = vmatpush1.bf16.msra.mxu0 %v784
    %1138 = vmatprep.subr.bf16.mxu0 %v789
    %1139 = vmatpush1.bf16.msra.mxu0 %v788
    %1140 = vmatprep.subr.bf16.mxu0 %v793
    %1141 = vmatpush1.bf16.msra.mxu0 %v792
    %1142 = vmatprep.subr.bf16.mxu0 %v797
    %1143 = vmatpush1.bf16.msra.mxu0 %v796
    %1144 = vmatprep.subr.bf16.mxu0 %v801
    %1145 = vmatpush1.bf16.msra.mxu0 %v800
    %1146 = vmatprep.mubr.bf16.mxu0 %v106
    %1147 = vmatmul.mubr.bf16.gmra.mrb[0].mxu0 %v105
    %v1148 = vpop.f32.mrb[0].mxu0
    %v1149 = vadd.f32 %v1108, %v1148
    %v1150 = vpop.f32.mrb[0].mxu0
    %v1151 = vadd.f32 %v1110, %v1150
    %v1152 = vpop.f32.mrb[0].mxu0
    %v1153 = vpop.f32.mrb[0].mxu0
    %1154 = vdwg.mxu0
    %1155 = vmatprep.subr.bf16.mxu0 %v805
    %1156 = vmatpush1.bf16.msra.mxu0 %v804
    %1157 = vmatprep.subr.bf16.mxu0 %v809
    %1158 = vmatpush1.bf16.msra.mxu0 %v808
    %1159 = vmatprep.subr.bf16.mxu0 0
    %1160 = vmatpush1.bf16.msra.mxu0 0
    %1161 = vmatprep.subr.bf16.mxu0 0
    %1162 = vmatpush1.bf16.msra.mxu0 0
    %1163 = vmatprep.subr.bf16.mxu0 0
    %1164 = vmatpush1.bf16.msra.mxu0 0
    %1165 = vmatprep.subr.bf16.mxu0 0
    %1166 = vmatpush1.bf16.msra.mxu0 0
    %1167 = vmatprep.subr.bf16.mxu0 0
    %1168 = vmatpush1.bf16.msra.mxu0 0
    %1169 = vmatprep.subr.bf16.mxu0 0
    %1170 = vmatpush1.bf16.msra.mxu0 0
    %1171 = vmatprep.subr.bf16.mxu0 0
    %1172 = vmatpush1.bf16.msra.mxu0 0
    %1173 = vmatprep.subr.bf16.mxu0 0
    %1174 = vmatpush1.bf16.msra.mxu0 0
    %1175 = vmatprep.subr.bf16.mxu0 0
    %1176 = vmatpush1.bf16.msra.mxu0 0
    %1177 = vmatprep.subr.bf16.mxu0 0
    %1178 = vmatpush1.bf16.msra.mxu0 0
    %1179 = vmatprep.subr.bf16.mxu0 0
    %1180 = vmatpush1.bf16.msra.mxu0 0
    %1181 = vmatprep.subr.bf16.mxu0 0
    %1182 = vmatpush1.bf16.msra.mxu0 0
    %1183 = vmatprep.subr.bf16.mxu0 0
    %1184 = vmatpush1.bf16.msra.mxu0 0
    %1185 = vmatprep.subr.bf16.mxu0 0
    %1186 = vmatpush1.bf16.msra.mxu0 0
    %1187 = vmatprep.mubr.bf16.mxu0 0
    %1188 = vmatmul.mubr.bf16.gmra.mrb[0].mxu0 %v948
    %v1189 = vpop.f32.mrb[0].mxu0
    %v1190 = vadd.f32 %v1149, %v1189
    %v1191 = vpop.f32.mrb[0].mxu0
    %v1192 = vadd.f32 %v1151, %v1191
    %v1193 = vpop.f32.mrb[0].mxu0
    %v1194 = vpop.f32.mrb[0].mxu0
    %1195 = vdwg.mxu0
    %v1196 = vmax.f32 %v1067, 0.0
    %v1197 = vmax.f32 %v1069, 0.0
    %v1198 = vmax.f32 %v1190, 0.0
    %v1199 = vmax.f32 %v1192, 0.0
    %v1200 = vpack.c.bf16 %v1196, %v1196
    %v1201 = vpack.c.bf16 %v1197, %v1197
    %v1202 = vpack.c.bf16 %v1198, %v1198
    %v1203 = vpack.c.bf16 %v1199, %v1199
    %v1204 = vld [vmem:[#allocation6] sm:$0xff]
    %v1205 = vld [vmem:[#allocation6 + $0x8] sm:$0xff]
    %v1206 = vld [vmem:[#allocation6 + $0x10] sm:$0xff]
    %v1207 = vld [vmem:[#allocation6 + $0x18] sm:$0xff]
    %v1208 = vld [vmem:[#allocation6 + $0x20] sm:$0xff]
    %v1209 = vld [vmem:[#allocation6 + $0x28] sm:$0xff]
    %v1210 = vld [vmem:[#allocation6 + $0x30] sm:$0xff]
    %v1211 = vld [vmem:[#allocation6 + $0x38] sm:$0xff]
    %v1212 = vld [vmem:[#allocation6 + $0x40] sm:$0xff]
    %v1213 = vld [vmem:[#allocation6 + $0x48] sm:$0xff]
    %v1214 = vld [vmem:[#allocation6 + $0x50] sm:$0xff]
    %v1215 = vld [vmem:[#allocation6 + $0x58] sm:$0xff]
    %v1216 = vld [vmem:[#allocation6 + $0x60] sm:$0xff]
    %v1217 = vld [vmem:[#allocation6 + $0x68] sm:$0xff]
    %v1218 = vld [vmem:[#allocation6 + $0x70] sm:$0xff]
    %v1219 = vld [vmem:[#allocation6 + $0x78] sm:$0xff]
    %v1220 = vld [vmem:[#allocation6 + $0x80] sm:$0xff]
    %v1221 = vld [vmem:[#allocation6 + $0x88] sm:$0xff]
    %v1222 = vld [vmem:[#allocation6 + $0x90] sm:$0xff]
    %v1223 = vld [vmem:[#allocation6 + $0x98] sm:$0xff]
    %v1224 = vld [vmem:[#allocation6 + $0xa0] sm:$0xff]
    %v1225 = vld [vmem:[#allocation6 + $0xa8] sm:$0xff]
    %v1226 = vld [vmem:[#allocation6 + $0xb0] sm:$0xff]
    %v1227 = vld [vmem:[#allocation6 + $0xb8] sm:$0xff]
    %v1228 = vld [vmem:[#allocation6 + $0xc0] sm:$0xff]
    %v1229 = vld [vmem:[#allocation6 + $0xc8] sm:$0xff]
    %v1230 = vld [vmem:[#allocation6 + $0xd0] sm:$0xff]
    %v1231 = vld [vmem:[#allocation6 + $0xd8] sm:$0xff]
    %v1232 = vld [vmem:[#allocation6 + $0xe0] sm:$0xff]
    %v1233 = vld [vmem:[#allocation6 + $0xe8] sm:$0xff]
    %v1234 = vld [vmem:[#allocation6 + $0xf0] sm:$0xff]
    %v1235 = vld [vmem:[#allocation6 + $0xf8] sm:$0xff]
    %v1236 = vld [vmem:[#allocation6 + $0x100] sm:$0xff]
    %v1237 = vld [vmem:[#allocation6 + $0x108] sm:$0xff]
    %v1238 = vld [vmem:[#allocation6 + $0x110] sm:$0xff]
    %v1239 = vld [vmem:[#allocation6 + $0x118] sm:$0xff]
    %v1240 = vld [vmem:[#allocation6 + $0x120] sm:$0xff]
    %v1241 = vld [vmem:[#allocation6 + $0x128] sm:$0xff]
    %v1242 = vld [vmem:[#allocation6 + $0x130] sm:$0xff]
    %v1243 = vld [vmem:[#allocation6 + $0x138] sm:$0xff]
    %v1244 = vld [vmem:[#allocation6 + $0x140] sm:$0xff]
    %v1245 = vld [vmem:[#allocation6 + $0x148] sm:$0xff]
    %v1246 = vld [vmem:[#allocation6 + $0x150] sm:$0xff]
    %v1247 = vld [vmem:[#allocation6 + $0x158] sm:$0xff]
    %v1248 = vld [vmem:[#allocation6 + $0x160] sm:$0xff]
    %v1249 = vld [vmem:[#allocation6 + $0x168] sm:$0xff]
    %v1250 = vld [vmem:[#allocation6 + $0x170] sm:$0xff]
    %v1251 = vld [vmem:[#allocation6 + $0x178] sm:$0xff]
    %v1252 = vld [vmem:[#allocation6 + $0x180] sm:$0xff]
    %v1253 = vld [vmem:[#allocation6 + $0x188] sm:$0xff]
    %v1254 = vld [vmem:[#allocation6 + $0x190] sm:$0xff]
    %v1255 = vld [vmem:[#allocation6 + $0x198] sm:$0xff]
    %v1256 = vld [vmem:[#allocation6 + $0x1a0] sm:$0xff]
    %v1257 = vld [vmem:[#allocation6 + $0x1a8] sm:$0xff]
    %v1258 = vld [vmem:[#allocation6 + $0x1b0] sm:$0xff]
    %v1259 = vld [vmem:[#allocation6 + $0x1b8] sm:$0xff]
    %v1260 = vld [vmem:[#allocation6 + $0x1c0] sm:$0xff]
    %v1261 = vld [vmem:[#allocation6 + $0x1c8] sm:$0xff]
    %v1262 = vld [vmem:[#allocation6 + $0x1d0] sm:$0xff]
    %v1263 = vld [vmem:[#allocation6 + $0x1d8] sm:$0xff]
    %v1264 = vld [vmem:[#allocation6 + $0x1e0] sm:$0xff]
    %v1265 = vld [vmem:[#allocation6 + $0x1e8] sm:$0xff]
    %v1266 = vld [vmem:[#allocation6 + $0x1f0] sm:$0xff]
    %v1267 = vld [vmem:[#allocation6 + $0x1f8] sm:$0xff]
    %v1268 = vld [vmem:[#allocation6 + $0x200] sm:$0xff]
    %v1269 = vld [vmem:[#allocation6 + $0x208] sm:$0xff]
    %v1270 = vld [vmem:[#allocation6 + $0x210] sm:$0xff]
    %v1271 = vld [vmem:[#allocation6 + $0x218] sm:$0xff]
    %v1272 = vld [vmem:[#allocation6 + $0x220] sm:$0xff]
    %v1273 = vld [vmem:[#allocation6 + $0x228] sm:$0xff]
    %v1274 = vld [vmem:[#allocation6 + $0x230] sm:$0xff]
    %v1275 = vld [vmem:[#allocation6 + $0x238] sm:$0xff]
    %v1276 = vld [vmem:[#allocation6 + $0x240] sm:$0xff]
    %v1277 = vld [vmem:[#allocation6 + $0x248] sm:$0xff]
    %v1278 = vld [vmem:[#allocation6 + $0x250] sm:$0xff]
    %v1279 = vld [vmem:[#allocation6 + $0x258] sm:$0xff]
    %v1280 = vld [vmem:[#allocation6 + $0x260] sm:$0xff]
    %v1281 = vld [vmem:[#allocation6 + $0x268] sm:$0xff]
    %v1282 = vld [vmem:[#allocation6 + $0x270] sm:$0xff]
    %v1283 = vld [vmem:[#allocation6 + $0x278] sm:$0xff]
    %v1284 = vld [vmem:[#allocation6 + $0x280] sm:$0xff]
    %v1285 = vld [vmem:[#allocation6 + $0x288] sm:$0xff]
    %v1286 = vld [vmem:[#allocation6 + $0x290] sm:$0xff]
    %v1287 = vld [vmem:[#allocation6 + $0x298] sm:$0xff]
    %v1288 = vld [vmem:[#allocation6 + $0x2a0] sm:$0xff]
    %v1289 = vld [vmem:[#allocation6 + $0x2a8] sm:$0xff]
    %v1290 = vld [vmem:[#allocation6 + $0x2b0] sm:$0xff]
    %v1291 = vld [vmem:[#allocation6 + $0x2b8] sm:$0xff]
    %v1292 = vld [vmem:[#allocation6 + $0x2c0] sm:$0xff]
    %v1293 = vld [vmem:[#allocation6 + $0x2c8] sm:$0xff]
    %v1294 = vld [vmem:[#allocation6 + $0x2d0] sm:$0xff]
    %v1295 = vld [vmem:[#allocation6 + $0x2d8] sm:$0xff]
    %v1296 = vld [vmem:[#allocation6 + $0x2e0] sm:$0xff]
    %v1297 = vld [vmem:[#allocation6 + $0x2e8] sm:$0xff]
    %v1298 = vld [vmem:[#allocation6 + $0x2f0] sm:$0xff]
    %v1299 = vld [vmem:[#allocation6 + $0x2f8] sm:$0xff]
    %v1300 = vld [vmem:[#allocation6 + $0x300] sm:$0xff]
    %v1301 = vld [vmem:[#allocation6 + $0x308] sm:$0xff]
    %v1302 = vld [vmem:[#allocation6 + $0x310] sm:$0xff]
    %v1303 = vld [vmem:[#allocation6 + $0x318] sm:$0xff]
    %v1304 = vld [vmem:[#allocation6 + $0x320] sm:$0xff]
    %v1305 = vld [vmem:[#allocation6 + $0x328] sm:$0xff]
    %v1306 = vld [vmem:[#allocation6 + $0x330] sm:$0xff]
    %v1307 = vld [vmem:[#allocation6 + $0x338] sm:$0xff]
    %v1308 = vld [vmem:[#allocation6 + $0x340] sm:$0xff]
    %v1309 = vld [vmem:[#allocation6 + $0x348] sm:$0xff]
    %v1310 = vld [vmem:[#allocation6 + $0x350] sm:$0xff]
    %v1311 = vld [vmem:[#allocation6 + $0x358] sm:$0xff]
    %v1312 = vld [vmem:[#allocation6 + $0x360] sm:$0xff]
    %v1313 = vld [vmem:[#allocation6 + $0x368] sm:$0xff]
    %v1314 = vld [vmem:[#allocation6 + $0x370] sm:$0xff]
    %v1315 = vld [vmem:[#allocation6 + $0x378] sm:$0xff]
    %v1316 = vld [vmem:[#allocation6 + $0x380] sm:$0xff]
    %v1317 = vld [vmem:[#allocation6 + $0x388] sm:$0xff]
    %v1318 = vld [vmem:[#allocation6 + $0x390] sm:$0xff]
    %v1319 = vld [vmem:[#allocation6 + $0x398] sm:$0xff]
    %v1320 = vld [vmem:[#allocation6 + $0x3a0] sm:$0xff]
    %v1321 = vld [vmem:[#allocation6 + $0x3a8] sm:$0xff]
    %v1322 = vld [vmem:[#allocation6 + $0x3b0] sm:$0xff]
    %v1323 = vld [vmem:[#allocation6 + $0x3b8] sm:$0xff]
    %v1324 = vld [vmem:[#allocation6 + $0x3c0] sm:$0xff]
    %v1325 = vld [vmem:[#allocation6 + $0x3c8] sm:$0xff]
    %v1326 = vld [vmem:[#allocation6 + $0x3d0] sm:$0xff]
    %v1327 = vld [vmem:[#allocation6 + $0x3d8] sm:$0xff]
    %v1328 = vld [vmem:[#allocation6 + $0x3e0] sm:$0xff]
    %v1329 = vld [vmem:[#allocation6 + $0x3e8] sm:$0xff]
    %v1330 = vld [vmem:[#allocation6 + $0x3f0] sm:$0xff]
    %v1331 = vld [vmem:[#allocation6 + $0x3f8] sm:$0xff]
    %v1332 = vld [vmem:[#allocation6 + $0x400] sm:$0xff]
    %v1333 = vld [vmem:[#allocation6 + $0x408] sm:$0xff]
    %v1334 = vld [vmem:[#allocation6 + $0x410] sm:$0xff]
    %v1335 = vld [vmem:[#allocation6 + $0x418] sm:$0xff]
    %v1336 = vld [vmem:[#allocation6 + $0x420] sm:$0xff]
    %v1337 = vld [vmem:[#allocation6 + $0x428] sm:$0xff]
    %v1338 = vld [vmem:[#allocation6 + $0x430] sm:$0xff]
    %v1339 = vld [vmem:[#allocation6 + $0x438] sm:$0xff]
    %v1340 = vld [vmem:[#allocation6 + $0x440] sm:$0xff]
    %v1341 = vld [vmem:[#allocation6 + $0x448] sm:$0xff]
    %v1342 = vld [vmem:[#allocation6 + $0x450] sm:$0xff]
    %v1343 = vld [vmem:[#allocation6 + $0x458] sm:$0xff]
    %v1344 = vld [vmem:[#allocation6 + $0x460] sm:$0xff]
    %v1345 = vld [vmem:[#allocation6 + $0x468] sm:$0xff]
    %v1346 = vld [vmem:[#allocation6 + $0x470] sm:$0xff]
    %v1347 = vld [vmem:[#allocation6 + $0x478] sm:$0xff]
    %v1348 = vld [vmem:[#allocation6 + $0x480] sm:$0xff]
    %v1349 = vld [vmem:[#allocation6 + $0x488] sm:$0xff]
    %v1350 = vld [vmem:[#allocation6 + $0x490] sm:$0xff]
    %v1351 = vld [vmem:[#allocation6 + $0x498] sm:$0xff]
    %v1352 = vld [vmem:[#allocation6 + $0x4a0] sm:$0xff]
    %v1353 = vld [vmem:[#allocation6 + $0x4a8] sm:$0xff]
    %v1354 = vld [vmem:[#allocation6 + $0x4b0] sm:$0xff]
    %v1355 = vld [vmem:[#allocation6 + $0x4b8] sm:$0xff]
    %v1356 = vld [vmem:[#allocation6 + $0x4c0] sm:$0xff]
    %v1357 = vld [vmem:[#allocation6 + $0x4c8] sm:$0xff]
    %v1358 = vld [vmem:[#allocation6 + $0x4d0] sm:$0xff]
    %v1359 = vld [vmem:[#allocation6 + $0x4d8] sm:$0xff]
    %v1360 = vld [vmem:[#allocation6 + $0x4e0] sm:$0xff]
    %v1361 = vld [vmem:[#allocation6 + $0x4e8] sm:$0xff]
    %v1362 = vld [vmem:[#allocation6 + $0x4f0] sm:$0xff]
    %v1363 = vld [vmem:[#allocation6 + $0x4f8] sm:$0xff]
    %v1364 = vld [vmem:[#allocation6 + $0x500] sm:$0xff]
    %v1365 = vld [vmem:[#allocation6 + $0x508] sm:$0xff]
    %v1366 = vld [vmem:[#allocation6 + $0x510] sm:$0xff]
    %v1367 = vld [vmem:[#allocation6 + $0x518] sm:$0xff]
    %v1368 = vld [vmem:[#allocation6 + $0x520] sm:$0xff]
    %v1369 = vld [vmem:[#allocation6 + $0x528] sm:$0xff]
    %v1370 = vld [vmem:[#allocation6 + $0x530] sm:$0xff]
    %v1371 = vld [vmem:[#allocation6 + $0x538] sm:$0xff]
    %v1372 = vld [vmem:[#allocation6 + $0x540] sm:$0xff]
    %v1373 = vld [vmem:[#allocation6 + $0x548] sm:$0xff]
    %v1374 = vld [vmem:[#allocation6 + $0x550] sm:$0xff]
    %v1375 = vld [vmem:[#allocation6 + $0x558] sm:$0xff]
    %v1376 = vld [vmem:[#allocation6 + $0x560] sm:$0xff]
    %v1377 = vld [vmem:[#allocation6 + $0x568] sm:$0xff]
    %v1378 = vld [vmem:[#allocation6 + $0x570] sm:$0xff]
    %v1379 = vld [vmem:[#allocation6 + $0x578] sm:$0xff]
    %v1380 = vld [vmem:[#allocation6 + $0x580] sm:$0xff]
    %v1381 = vld [vmem:[#allocation6 + $0x588] sm:$0xff]
    %v1382 = vld [vmem:[#allocation6 + $0x590] sm:$0xff]
    %v1383 = vld [vmem:[#allocation6 + $0x598] sm:$0xff]
    %v1384 = vld [vmem:[#allocation6 + $0x5a0] sm:$0xff]
    %v1385 = vld [vmem:[#allocation6 + $0x5a8] sm:$0xff]
    %v1386 = vld [vmem:[#allocation6 + $0x5b0] sm:$0xff]
    %v1387 = vld [vmem:[#allocation6 + $0x5b8] sm:$0xff]
    %v1388 = vld [vmem:[#allocation6 + $0x5c0] sm:$0xff]
    %v1389 = vld [vmem:[#allocation6 + $0x5c8] sm:$0xff]
    %v1390 = vld [vmem:[#allocation6 + $0x5d0] sm:$0xff]
    %v1391 = vld [vmem:[#allocation6 + $0x5d8] sm:$0xff]
    %v1392 = vld [vmem:[#allocation6 + $0x5e0] sm:$0xff]
    %v1393 = vld [vmem:[#allocation6 + $0x5e8] sm:$0xff]
    %v1394 = vld [vmem:[#allocation6 + $0x5f0] sm:$0xff]
    %v1395 = vld [vmem:[#allocation6 + $0x5f8] sm:$0xff]
    %v1396 = vld [vmem:[#allocation6 + $0x600] sm:$0xff]
    %v1397 = vld [vmem:[#allocation6 + $0x608] sm:$0xff]
    %v1398 = vld [vmem:[#allocation6 + $0x610] sm:$0xff]
    %v1399 = vld [vmem:[#allocation6 + $0x618] sm:$0xff]
    %v1400 = vld [vmem:[#allocation6 + $0x620] sm:$0xff]
    %v1401 = vld [vmem:[#allocation6 + $0x628] sm:$0xff]
    %v1402 = vld [vmem:[#allocation6 + $0x630] sm:$0xff]
    %v1403 = vld [vmem:[#allocation6 + $0x638] sm:$0xff]
    %v1404 = vld [vmem:[#allocation6 + $0x640] sm:$0xff]
    %v1405 = vld [vmem:[#allocation6 + $0x648] sm:$0xff]
    %v1406 = vld [vmem:[#allocation6 + $0x650] sm:$0xff]
    %v1407 = vld [vmem:[#allocation6 + $0x658] sm:$0xff]
    %v1408 = vld [vmem:[#allocation6 + $0x660] sm:$0xff]
    %v1409 = vld [vmem:[#allocation6 + $0x668] sm:$0xff]
    %v1410 = vld [vmem:[#allocation6 + $0x670] sm:$0xff]
    %v1411 = vld [vmem:[#allocation6 + $0x678] sm:$0xff]
    %v1412 = vld [vmem:[#allocation6 + $0x680] sm:$0xff]
    %v1413 = vld [vmem:[#allocation6 + $0x688] sm:$0xff]
    %v1414 = vld [vmem:[#allocation6 + $0x690] sm:$0xff]
    %v1415 = vld [vmem:[#allocation6 + $0x698] sm:$0xff]
    %v1416 = vld [vmem:[#allocation6 + $0x6a0] sm:$0xff]
    %v1417 = vld [vmem:[#allocation6 + $0x6a8] sm:$0xff]
    %v1418 = vld [vmem:[#allocation6 + $0x6b0] sm:$0xff]
    %v1419 = vld [vmem:[#allocation6 + $0x6b8] sm:$0xff]
    %v1420 = vld [vmem:[#allocation6 + $0x6c0] sm:$0xff]
    %v1421 = vld [vmem:[#allocation6 + $0x6c8] sm:$0xff]
    %v1422 = vld [vmem:[#allocation6 + $0x6d0] sm:$0xff]
    %v1423 = vld [vmem:[#allocation6 + $0x6d8] sm:$0xff]
    %v1424 = vld [vmem:[#allocation6 + $0x6e0] sm:$0xff]
    %v1425 = vld [vmem:[#allocation6 + $0x6e8] sm:$0xff]
    %v1426 = vld [vmem:[#allocation6 + $0x6f0] sm:$0xff]
    %v1427 = vld [vmem:[#allocation6 + $0x6f8] sm:$0xff]
    %v1428 = vld [vmem:[#allocation6 + $0x700] sm:$0xff]
    %v1429 = vld [vmem:[#allocation6 + $0x708] sm:$0xff]
    %v1430 = vld [vmem:[#allocation6 + $0x710] sm:$0xff]
    %v1431 = vld [vmem:[#allocation6 + $0x718] sm:$0xff]
    %v1432 = vld [vmem:[#allocation6 + $0x720] sm:$0xff]
    %v1433 = vld [vmem:[#allocation6 + $0x728] sm:$0xff]
    %v1434 = vld [vmem:[#allocation6 + $0x730] sm:$0xff]
    %v1435 = vld [vmem:[#allocation6 + $0x738] sm:$0xff]
    %v1436 = vld [vmem:[#allocation6 + $0x740] sm:$0xff]
    %v1437 = vld [vmem:[#allocation6 + $0x748] sm:$0xff]
    %v1438 = vld [vmem:[#allocation6 + $0x750] sm:$0xff]
    %v1439 = vld [vmem:[#allocation6 + $0x758] sm:$0xff]
    %v1440 = vld [vmem:[#allocation6 + $0x760] sm:$0xff]
    %v1441 = vld [vmem:[#allocation6 + $0x768] sm:$0xff]
    %v1442 = vld [vmem:[#allocation6 + $0x770] sm:$0xff]
    %v1443 = vld [vmem:[#allocation6 + $0x778] sm:$0xff]
    %v1444 = vld [vmem:[#allocation6 + $0x780] sm:$0xff]
    %v1445 = vld [vmem:[#allocation6 + $0x788] sm:$0xff]
    %v1446 = vld [vmem:[#allocation6 + $0x790] sm:$0xff]
    %v1447 = vld [vmem:[#allocation6 + $0x798] sm:$0xff]
    %v1448 = vld [vmem:[#allocation6 + $0x7a0] sm:$0xff]
    %v1449 = vld [vmem:[#allocation6 + $0x7a8] sm:$0xff]
    %v1450 = vld [vmem:[#allocation6 + $0x7b0] sm:$0xff]
    %v1451 = vld [vmem:[#allocation6 + $0x7b8] sm:$0xff]
    %v1452 = vld [vmem:[#allocation6 + $0x7c0] sm:$0xff]
    %v1453 = vld [vmem:[#allocation6 + $0x7c8] sm:$0xff]
    %v1454 = vld [vmem:[#allocation6 + $0x7d0] sm:$0xff]
    %v1455 = vld [vmem:[#allocation6 + $0x7d8] sm:$0xff]
    %v1456 = vld [vmem:[#allocation6 + $0x7e0] sm:$0xff]
    %v1457 = vld [vmem:[#allocation6 + $0x7e8] sm:$0xff]
    %v1458 = vld [vmem:[#allocation6 + $0x7f0] sm:$0xff]
    %v1459 = vld [vmem:[#allocation6 + $0x7f8] sm:$0xff]
    %v1460 = vld [vmem:[%s4] sm:$0xff]
    %v1462 = vlaneseq
    %v1463 = vshrl.u32 %v1462, 7
    %v1464 = vsub.s32 0, %v1463
    %v1465 = vrot.slane %v1460, %v1464
    %v1466 = vlaneseq
    %v1467 = vshrl.u32 %v1466, 7
    %v1468 = vsub.s32 1, %v1467
    %v1469 = vrot.slane %v1460, %v1468
    %v1470 = vlaneseq
    %v1471 = vshrl.u32 %v1470, 7
    %v1472 = vsub.s32 2, %v1471
    %v1473 = vrot.slane %v1460, %v1472
    %v1474 = vlaneseq
    %v1475 = vshrl.u32 %v1474, 7
    %v1476 = vsub.s32 3, %v1475
    %v1477 = vrot.slane %v1460, %v1476
    %v1478 = vlaneseq
    %v1479 = vshrl.u32 %v1478, 7
    %v1480 = vsub.s32 4, %v1479
    %v1481 = vrot.slane %v1460, %v1480
    %v1482 = vlaneseq
    %v1483 = vshrl.u32 %v1482, 7
    %v1484 = vsub.s32 5, %v1483
    %v1485 = vrot.slane %v1460, %v1484
    %v1486 = vlaneseq
    %v1487 = vshrl.u32 %v1486, 7
    %v1488 = vsub.s32 6, %v1487
    %v1489 = vrot.slane %v1460, %v1488
    %v1490 = vlaneseq
    %v1491 = vshrl.u32 %v1490, 7
    %v1492 = vsub.s32 7, %v1491
    %v1493 = vrot.slane %v1460, %v1492
    %v1758 = vunpack.c.l.b16 %v1204
    %v1759 = vunpack.c.h.b16 %v1204
    %v1760 = vunpack.c.l.b16 %v1205
    %v1761 = vunpack.c.h.b16 %v1205
    %v1762 = vunpack.c.l.b16 %v1206
    %v1763 = vunpack.c.h.b16 %v1206
    %v1764 = vunpack.c.l.b16 %v1207
    %v1765 = vunpack.c.h.b16 %v1207
    %v1766 = vunpack.c.l.b16 %v1208
    %v1767 = vunpack.c.h.b16 %v1208
    %v1768 = vunpack.c.l.b16 %v1209
    %v1769 = vunpack.c.h.b16 %v1209
    %v1770 = vunpack.c.l.b16 %v1210
    %v1771 = vunpack.c.h.b16 %v1210
    %v1772 = vunpack.c.l.b16 %v1211
    %v1773 = vunpack.c.h.b16 %v1211
    %v1774 = vunpack.c.l.b16 %v1212
    %v1775 = vunpack.c.h.b16 %v1212
    %v1776 = vunpack.c.l.b16 %v1213
    %v1777 = vunpack.c.h.b16 %v1213
    %v1778 = vunpack.c.l.b16 %v1214
    %v1779 = vunpack.c.h.b16 %v1214
    %v1780 = vunpack.c.l.b16 %v1215
    %v1781 = vunpack.c.h.b16 %v1215
    %v1782 = vunpack.c.l.b16 %v1216
    %v1783 = vunpack.c.h.b16 %v1216
    %v1784 = vunpack.c.l.b16 %v1217
    %v1785 = vunpack.c.h.b16 %v1217
    %v1786 = vunpack.c.l.b16 %v1218
    %v1787 = vunpack.c.h.b16 %v1218
    %v1788 = vunpack.c.l.b16 %v1219
    %v1789 = vunpack.c.h.b16 %v1219
    %v1790 = vunpack.c.l.b16 %v1220
    %v1791 = vunpack.c.h.b16 %v1220
    %v1792 = vunpack.c.l.b16 %v1221
    %v1793 = vunpack.c.h.b16 %v1221
    %v1794 = vunpack.c.l.b16 %v1222
    %v1795 = vunpack.c.h.b16 %v1222
    %v1796 = vunpack.c.l.b16 %v1223
    %v1797 = vunpack.c.h.b16 %v1223
    %v1798 = vunpack.c.l.b16 %v1224
    %v1799 = vunpack.c.h.b16 %v1224
    %v1800 = vunpack.c.l.b16 %v1225
    %v1801 = vunpack.c.h.b16 %v1225
    %v1802 = vunpack.c.l.b16 %v1226
    %v1803 = vunpack.c.h.b16 %v1226
    %v1804 = vunpack.c.l.b16 %v1227
    %v1805 = vunpack.c.h.b16 %v1227
    %v1806 = vunpack.c.l.b16 %v1228
    %v1807 = vunpack.c.h.b16 %v1228
    %v1808 = vunpack.c.l.b16 %v1229
    %v1809 = vunpack.c.h.b16 %v1229
    %v1810 = vunpack.c.l.b16 %v1230
    %v1811 = vunpack.c.h.b16 %v1230
    %v1812 = vunpack.c.l.b16 %v1231
    %v1813 = vunpack.c.h.b16 %v1231
    %v1814 = vunpack.c.l.b16 %v1232
    %v1815 = vunpack.c.h.b16 %v1232
    %v1816 = vunpack.c.l.b16 %v1233
    %v1817 = vunpack.c.h.b16 %v1233
    %v1818 = vunpack.c.l.b16 %v1234
    %v1819 = vunpack.c.h.b16 %v1234
    %v1820 = vunpack.c.l.b16 %v1235
    %v1821 = vunpack.c.h.b16 %v1235
    %v1822 = vunpack.c.l.b16 %v1236
    %v1823 = vunpack.c.h.b16 %v1236
    %v1824 = vunpack.c.l.b16 %v1237
    %v1825 = vunpack.c.h.b16 %v1237
    %v1826 = vunpack.c.l.b16 %v1238
    %v1827 = vunpack.c.h.b16 %v1238
    %v1828 = vunpack.c.l.b16 %v1239
    %v1829 = vunpack.c.h.b16 %v1239
    %v1830 = vunpack.c.l.b16 %v1240
    %v1831 = vunpack.c.h.b16 %v1240
    %v1832 = vunpack.c.l.b16 %v1241
    %v1833 = vunpack.c.h.b16 %v1241
    %v1834 = vunpack.c.l.b16 %v1242
    %v1835 = vunpack.c.h.b16 %v1242
    %v1836 = vunpack.c.l.b16 %v1243
    %v1837 = vunpack.c.h.b16 %v1243
    %v1838 = vunpack.c.l.b16 %v1244
    %v1839 = vunpack.c.h.b16 %v1244
    %v1840 = vunpack.c.l.b16 %v1245
    %v1841 = vunpack.c.h.b16 %v1245
    %v1842 = vunpack.c.l.b16 %v1246
    %v1843 = vunpack.c.h.b16 %v1246
    %v1844 = vunpack.c.l.b16 %v1247
    %v1845 = vunpack.c.h.b16 %v1247
    %v1846 = vunpack.c.l.b16 %v1248
    %v1847 = vunpack.c.h.b16 %v1248
    %v1848 = vunpack.c.l.b16 %v1249
    %v1849 = vunpack.c.h.b16 %v1249
    %v1850 = vunpack.c.l.b16 %v1250
    %v1851 = vunpack.c.h.b16 %v1250
    %v1852 = vunpack.c.l.b16 %v1251
    %v1853 = vunpack.c.h.b16 %v1251
    %v1854 = vunpack.c.l.b16 %v1252
    %v1855 = vunpack.c.h.b16 %v1252
    %v1856 = vunpack.c.l.b16 %v1253
    %v1857 = vunpack.c.h.b16 %v1253
    %v1858 = vunpack.c.l.b16 %v1254
    %v1859 = vunpack.c.h.b16 %v1254
    %v1860 = vunpack.c.l.b16 %v1255
    %v1861 = vunpack.c.h.b16 %v1255
    %v1862 = vunpack.c.l.b16 %v1256
    %v1863 = vunpack.c.h.b16 %v1256
    %v1864 = vunpack.c.l.b16 %v1257
    %v1865 = vunpack.c.h.b16 %v1257
    %v1866 = vunpack.c.l.b16 %v1258
    %v1867 = vunpack.c.h.b16 %v1258
    %v1868 = vunpack.c.l.b16 %v1259
    %v1869 = vunpack.c.h.b16 %v1259
    %v1870 = vunpack.c.l.b16 %v1260
    %v1871 = vunpack.c.h.b16 %v1260
    %v1872 = vunpack.c.l.b16 %v1261
    %v1873 = vunpack.c.h.b16 %v1261
    %v1874 = vunpack.c.l.b16 %v1262
    %v1875 = vunpack.c.h.b16 %v1262
    %v1876 = vunpack.c.l.b16 %v1263
    %v1877 = vunpack.c.h.b16 %v1263
    %v1878 = vunpack.c.l.b16 %v1264
    %v1879 = vunpack.c.h.b16 %v1264
    %v1880 = vunpack.c.l.b16 %v1265
    %v1881 = vunpack.c.h.b16 %v1265
    %v1882 = vunpack.c.l.b16 %v1266
    %v1883 = vunpack.c.h.b16 %v1266
    %v1884 = vunpack.c.l.b16 %v1267
    %v1885 = vunpack.c.h.b16 %v1267
    %v1886 = vunpack.c.l.b16 %v1268
    %v1887 = vunpack.c.h.b16 %v1268
    %v1888 = vunpack.c.l.b16 %v1269
    %v1889 = vunpack.c.h.b16 %v1269
    %v1890 = vunpack.c.l.b16 %v1270
    %v1891 = vunpack.c.h.b16 %v1270
    %v1892 = vunpack.c.l.b16 %v1271
    %v1893 = vunpack.c.h.b16 %v1271
    %v1894 = vunpack.c.l.b16 %v1272
    %v1895 = vunpack.c.h.b16 %v1272
    %v1896 = vunpack.c.l.b16 %v1273
    %v1897 = vunpack.c.h.b16 %v1273
    %v1898 = vunpack.c.l.b16 %v1274
    %v1899 = vunpack.c.h.b16 %v1274
    %v1900 = vunpack.c.l.b16 %v1275
    %v1901 = vunpack.c.h.b16 %v1275
    %v1902 = vunpack.c.l.b16 %v1276
    %v1903 = vunpack.c.h.b16 %v1276
    %v1904 = vunpack.c.l.b16 %v1277
    %v1905 = vunpack.c.h.b16 %v1277
    %v1906 = vunpack.c.l.b16 %v1278
    %v1907 = vunpack.c.h.b16 %v1278
    %v1908 = vunpack.c.l.b16 %v1279
    %v1909 = vunpack.c.h.b16 %v1279
    %v1910 = vunpack.c.l.b16 %v1280
    %v1911 = vunpack.c.h.b16 %v1280
    %v1912 = vunpack.c.l.b16 %v1281
    %v1913 = vunpack.c.h.b16 %v1281
    %v1914 = vunpack.c.l.b16 %v1282
    %v1915 = vunpack.c.h.b16 %v1282
    %v1916 = vunpack.c.l.b16 %v1283
    %v1917 = vunpack.c.h.b16 %v1283
    %v1918 = vunpack.c.l.b16 %v1284
    %v1919 = vunpack.c.h.b16 %v1284
    %v1920 = vunpack.c.l.b16 %v1285
    %v1921 = vunpack.c.h.b16 %v1285
    %v1922 = vunpack.c.l.b16 %v1286
    %v1923 = vunpack.c.h.b16 %v1286
    %v1924 = vunpack.c.l.b16 %v1287
    %v1925 = vunpack.c.h.b16 %v1287
    %v1926 = vunpack.c.l.b16 %v1288
    %v1927 = vunpack.c.h.b16 %v1288
    %v1928 = vunpack.c.l.b16 %v1289
    %v1929 = vunpack.c.h.b16 %v1289
    %v1930 = vunpack.c.l.b16 %v1290
    %v1931 = vunpack.c.h.b16 %v1290
    %v1932 = vunpack.c.l.b16 %v1291
    %v1933 = vunpack.c.h.b16 %v1291
    %v1934 = vunpack.c.l.b16 %v1292
    %v1935 = vunpack.c.h.b16 %v1292
    %v1936 = vunpack.c.l.b16 %v1293
    %v1937 = vunpack.c.h.b16 %v1293
    %v1938 = vunpack.c.l.b16 %v1294
    %v1939 = vunpack.c.h.b16 %v1294
    %v1940 = vunpack.c.l.b16 %v1295
    %v1941 = vunpack.c.h.b16 %v1295
    %v1942 = vunpack.c.l.b16 %v1296
    %v1943 = vunpack.c.h.b16 %v1296
    %v1944 = vunpack.c.l.b16 %v1297
    %v1945 = vunpack.c.h.b16 %v1297
    %v1946 = vunpack.c.l.b16 %v1298
    %v1947 = vunpack.c.h.b16 %v1298
    %v1948 = vunpack.c.l.b16 %v1299
    %v1949 = vunpack.c.h.b16 %v1299
    %v1950 = vunpack.c.l.b16 %v1300
    %v1951 = vunpack.c.h.b16 %v1300
    %v1952 = vunpack.c.l.b16 %v1301
    %v1953 = vunpack.c.h.b16 %v1301
    %v1954 = vunpack.c.l.b16 %v1302
    %v1955 = vunpack.c.h.b16 %v1302
    %v1956 = vunpack.c.l.b16 %v1303
    %v1957 = vunpack.c.h.b16 %v1303
    %v1958 = vunpack.c.l.b16 %v1304
    %v1959 = vunpack.c.h.b16 %v1304
    %v1960 = vunpack.c.l.b16 %v1305
    %v1961 = vunpack.c.h.b16 %v1305
    %v1962 = vunpack.c.l.b16 %v1306
    %v1963 = vunpack.c.h.b16 %v1306
    %v1964 = vunpack.c.l.b16 %v1307
    %v1965 = vunpack.c.h.b16 %v1307
    %v1966 = vunpack.c.l.b16 %v1308
    %v1967 = vunpack.c.h.b16 %v1308
    %v1968 = vunpack.c.l.b16 %v1309
    %v1969 = vunpack.c.h.b16 %v1309
    %v1970 = vunpack.c.l.b16 %v1310
    %v1971 = vunpack.c.h.b16 %v1310
    %v1972 = vunpack.c.l.b16 %v1311
    %v1973 = vunpack.c.h.b16 %v1311
    %v1974 = vunpack.c.l.b16 %v1312
    %v1975 = vunpack.c.h.b16 %v1312
    %v1976 = vunpack.c.l.b16 %v1313
    %v1977 = vunpack.c.h.b16 %v1313
    %v1978 = vunpack.c.l.b16 %v1314
    %v1979 = vunpack.c.h.b16 %v1314
    %v1980 = vunpack.c.l.b16 %v1315
    %v1981 = vunpack.c.h.b16 %v1315
    %v1982 = vunpack.c.l.b16 %v1316
    %v1983 = vunpack.c.h.b16 %v1316
    %v1984 = vunpack.c.l.b16 %v1317
    %v1985 = vunpack.c.h.b16 %v1317
    %v1986 = vunpack.c.l.b16 %v1318
    %v1987 = vunpack.c.h.b16 %v1318
    %v1988 = vunpack.c.l.b16 %v1319
    %v1989 = vunpack.c.h.b16 %v1319
    %v1990 = vunpack.c.l.b16 %v1320
    %v1991 = vunpack.c.h.b16 %v1320
    %v1992 = vunpack.c.l.b16 %v1321
    %v1993 = vunpack.c.h.b16 %v1321
    %v1994 = vunpack.c.l.b16 %v1322
    %v1995 = vunpack.c.h.b16 %v1322
    %v1996 = vunpack.c.l.b16 %v1323
    %v1997 = vunpack.c.h.b16 %v1323
    %v1998 = vunpack.c.l.b16 %v1324
    %v1999 = vunpack.c.h.b16 %v1324
    %v2000 = vunpack.c.l.b16 %v1325
    %v2001 = vunpack.c.h.b16 %v1325
    %v2002 = vunpack.c.l.b16 %v1326
    %v2003 = vunpack.c.h.b16 %v1326
    %v2004 = vunpack.c.l.b16 %v1327
    %v2005 = vunpack.c.h.b16 %v1327
    %v2006 = vunpack.c.l.b16 %v1328
    %v2007 = vunpack.c.h.b16 %v1328
    %v2008 = vunpack.c.l.b16 %v1329
    %v2009 = vunpack.c.h.b16 %v1329
    %v2010 = vunpack.c.l.b16 %v1330
    %v2011 = vunpack.c.h.b16 %v1330
    %v2012 = vunpack.c.l.b16 %v1331
    %v2013 = vunpack.c.h.b16 %v1331
    %v2014 = vunpack.c.l.b16 %v1332
    %v2015 = vunpack.c.h.b16 %v1332
    %v2016 = vunpack.c.l.b16 %v1333
    %v2017 = vunpack.c.h.b16 %v1333
    %v2018 = vunpack.c.l.b16 %v1334
    %v2019 = vunpack.c.h.b16 %v1334
    %v2020 = vunpack.c.l.b16 %v1335
    %v2021 = vunpack.c.h.b16 %v1335
    %v2022 = vunpack.c.l.b16 %v1336
    %v2023 = vunpack.c.h.b16 %v1336
    %v2024 = vunpack.c.l.b16 %v1337
    %v2025 = vunpack.c.h.b16 %v1337
    %v2026 = vunpack.c.l.b16 %v1338
    %v2027 = vunpack.c.h.b16 %v1338
    %v2028 = vunpack.c.l.b16 %v1339
    %v2029 = vunpack.c.h.b16 %v1339
    %v2030 = vunpack.c.l.b16 %v1340
    %v2031 = vunpack.c.h.b16 %v1340
    %v2032 = vunpack.c.l.b16 %v1341
    %v2033 = vunpack.c.h.b16 %v1341
    %v2034 = vunpack.c.l.b16 %v1342
    %v2035 = vunpack.c.h.b16 %v1342
    %v2036 = vunpack.c.l.b16 %v1343
    %v2037 = vunpack.c.h.b16 %v1343
    %v2038 = vunpack.c.l.b16 %v1344
    %v2039 = vunpack.c.h.b16 %v1344
    %v2040 = vunpack.c.l.b16 %v1345
    %v2041 = vunpack.c.h.b16 %v1345
    %v2042 = vunpack.c.l.b16 %v1346
    %v2043 = vunpack.c.h.b16 %v1346
    %v2044 = vunpack.c.l.b16 %v1347
    %v2045 = vunpack.c.h.b16 %v1347
    %v2046 = vunpack.c.l.b16 %v1348
    %v2047 = vunpack.c.h.b16 %v1348
    %v2048 = vunpack.c.l.b16 %v1349
    %v2049 = vunpack.c.h.b16 %v1349
    %v2050 = vunpack.c.l.b16 %v1350
    %v2051 = vunpack.c.h.b16 %v1350
    %v2052 = vunpack.c.l.b16 %v1351
    %v2053 = vunpack.c.h.b16 %v1351
    %v2054 = vunpack.c.l.b16 %v1352
    %v2055 = vunpack.c.h.b16 %v1352
    %v2056 = vunpack.c.l.b16 %v1353
    %v2057 = vunpack.c.h.b16 %v1353
    %v2058 = vunpack.c.l.b16 %v1354
    %v2059 = vunpack.c.h.b16 %v1354
    %v2060 = vunpack.c.l.b16 %v1355
    %v2061 = vunpack.c.h.b16 %v1355
    %v2062 = vunpack.c.l.b16 %v1356
    %v2063 = vunpack.c.h.b16 %v1356
    %v2064 = vunpack.c.l.b16 %v1357
    %v2065 = vunpack.c.h.b16 %v1357
    %v2066 = vunpack.c.l.b16 %v1358
    %v2067 = vunpack.c.h.b16 %v1358
    %v2068 = vunpack.c.l.b16 %v1359
    %v2069 = vunpack.c.h.b16 %v1359
    %v2070 = vunpack.c.l.b16 %v1360
    %v2071 = vunpack.c.h.b16 %v1360
    %v2072 = vunpack.c.l.b16 %v1361
    %v2073 = vunpack.c.h.b16 %v1361
    %v2074 = vunpack.c.l.b16 %v1362
    %v2075 = vunpack.c.h.b16 %v1362
    %v2076 = vunpack.c.l.b16 %v1363
    %v2077 = vunpack.c.h.b16 %v1363
    %v2078 = vunpack.c.l.b16 %v1364
    %v2079 = vunpack.c.h.b16 %v1364
    %v2080 = vunpack.c.l.b16 %v1365
    %v2081 = vunpack.c.h.b16 %v1365
    %v2082 = vunpack.c.l.b16 %v1366
    %v2083 = vunpack.c.h.b16 %v1366
    %v2084 = vunpack.c.l.b16 %v1367
    %v2085 = vunpack.c.h.b16 %v1367
    %v2086 = vunpack.c.l.b16 %v1368
    %v2087 = vunpack.c.h.b16 %v1368
    %v2088 = vunpack.c.l.b16 %v1369
    %v2089 = vunpack.c.h.b16 %v1369
    %v2090 = vunpack.c.l.b16 %v1370
    %v2091 = vunpack.c.h.b16 %v1370
    %v2092 = vunpack.c.l.b16 %v1371
    %v2093 = vunpack.c.h.b16 %v1371
    %v2094 = vunpack.c.l.b16 %v1372
    %v2095 = vunpack.c.h.b16 %v1372
    %v2096 = vunpack.c.l.b16 %v1373
    %v2097 = vunpack.c.h.b16 %v1373
    %v2098 = vunpack.c.l.b16 %v1374
    %v2099 = vunpack.c.h.b16 %v1374
    %v2100 = vunpack.c.l.b16 %v1375
    %v2101 = vunpack.c.h.b16 %v1375
    %v2102 = vunpack.c.l.b16 %v1376
    %v2103 = vunpack.c.h.b16 %v1376
    %v2104 = vunpack.c.l.b16 %v1377
    %v2105 = vunpack.c.h.b16 %v1377
    %v2106 = vunpack.c.l.b16 %v1378
    %v2107 = vunpack.c.h.b16 %v1378
    %v2108 = vunpack.c.l.b16 %v1379
    %v2109 = vunpack.c.h.b16 %v1379
    %v2110 = vunpack.c.l.b16 %v1380
    %v2111 = vunpack.c.h.b16 %v1380
    %v2112 = vunpack.c.l.b16 %v1381
    %v2113 = vunpack.c.h.b16 %v1381
    %v2114 = vunpack.c.l.b16 %v1382
    %v2115 = vunpack.c.h.b16 %v1382
    %v2116 = vunpack.c.l.b16 %v1383
    %v2117 = vunpack.c.h.b16 %v1383
    %v2118 = vunpack.c.l.b16 %v1384
    %v2119 = vunpack.c.h.b16 %v1384
    %v2120 = vunpack.c.l.b16 %v1385
    %v2121 = vunpack.c.h.b16 %v1385
    %v2122 = vunpack.c.l.b16 %v1386
    %v2123 = vunpack.c.h.b16 %v1386
    %v2124 = vunpack.c.l.b16 %v1387
    %v2125 = vunpack.c.h.b16 %v1387
    %v2126 = vunpack.c.l.b16 %v1388
    %v2127 = vunpack.c.h.b16 %v1388
    %v2128 = vunpack.c.l.b16 %v1389
    %v2129 = vunpack.c.h.b16 %v1389
    %v2130 = vunpack.c.l.b16 %v1390
    %v2131 = vunpack.c.h.b16 %v1390
    %v2132 = vunpack.c.l.b16 %v1391
    %v2133 = vunpack.c.h.b16 %v1391
    %v2134 = vunpack.c.l.b16 %v1392
    %v2135 = vunpack.c.h.b16 %v1392
    %v2136 = vunpack.c.l.b16 %v1393
    %v2137 = vunpack.c.h.b16 %v1393
    %v2138 = vunpack.c.l.b16 %v1394
    %v2139 = vunpack.c.h.b16 %v1394
    %v2140 = vunpack.c.l.b16 %v1395
    %v2141 = vunpack.c.h.b16 %v1395
    %v2142 = vunpack.c.l.b16 %v1396
    %v2143 = vunpack.c.h.b16 %v1396
    %v2144 = vunpack.c.l.b16 %v1397
    %v2145 = vunpack.c.h.b16 %v1397
    %v2146 = vunpack.c.l.b16 %v1398
    %v2147 = vunpack.c.h.b16 %v1398
    %v2148 = vunpack.c.l.b16 %v1399
    %v2149 = vunpack.c.h.b16 %v1399
    %v2150 = vunpack.c.l.b16 %v1400
    %v2151 = vunpack.c.h.b16 %v1400
    %v2152 = vunpack.c.l.b16 %v1401
    %v2153 = vunpack.c.h.b16 %v1401
    %v2154 = vunpack.c.l.b16 %v1402
    %v2155 = vunpack.c.h.b16 %v1402
    %v2156 = vunpack.c.l.b16 %v1403
    %v2157 = vunpack.c.h.b16 %v1403
    %v2158 = vunpack.c.l.b16 %v1404
    %v2159 = vunpack.c.h.b16 %v1404
    %v2160 = vunpack.c.l.b16 %v1405
    %v2161 = vunpack.c.h.b16 %v1405
    %v2162 = vunpack.c.l.b16 %v1406
    %v2163 = vunpack.c.h.b16 %v1406
    %v2164 = vunpack.c.l.b16 %v1407
    %v2165 = vunpack.c.h.b16 %v1407
    %v2166 = vunpack.c.l.b16 %v1408
    %v2167 = vunpack.c.h.b16 %v1408
    %v2168 = vunpack.c.l.b16 %v1409
    %v2169 = vunpack.c.h.b16 %v1409
    %v2170 = vunpack.c.l.b16 %v1410
    %v2171 = vunpack.c.h.b16 %v1410
    %v2172 = vunpack.c.l.b16 %v1411
    %v2173 = vunpack.c.h.b16 %v1411
    %v2174 = vunpack.c.l.b16 %v1412
    %v2175 = vunpack.c.h.b16 %v1412
    %v2176 = vunpack.c.l.b16 %v1413
    %v2177 = vunpack.c.h.b16 %v1413
    %v2178 = vunpack.c.l.b16 %v1414
    %v2179 = vunpack.c.h.b16 %v1414
    %v2180 = vunpack.c.l.b16 %v1415
    %v2181 = vunpack.c.h.b16 %v1415
    %v2182 = vunpack.c.l.b16 %v1416
    %v2183 = vunpack.c.h.b16 %v1416
    %v2184 = vunpack.c.l.b16 %v1417
    %v2185 = vunpack.c.h.b16 %v1417
    %v2186 = vunpack.c.l.b16 %v1418
    %v2187 = vunpack.c.h.b16 %v1418
    %v2188 = vunpack.c.l.b16 %v1419
    %v2189 = vunpack.c.h.b16 %v1419
    %v2190 = vunpack.c.l.b16 %v1420
    %v2191 = vunpack.c.h.b16 %v1420
    %v2192 = vunpack.c.l.b16 %v1421
    %v2193 = vunpack.c.h.b16 %v1421
    %v2194 = vunpack.c.l.b16 %v1422
    %v2195 = vunpack.c.h.b16 %v1422
    %v2196 = vunpack.c.l.b16 %v1423
    %v2197 = vunpack.c.h.b16 %v1423
    %v2198 = vunpack.c.l.b16 %v1424
    %v2199 = vunpack.c.h.b16 %v1424
    %v2200 = vunpack.c.l.b16 %v1425
    %v2201 = vunpack.c.h.b16 %v1425
    %v2202 = vunpack.c.l.b16 %v1426
    %v2203 = vunpack.c.h.b16 %v1426
    %v2204 = vunpack.c.l.b16 %v1427
    %v2205 = vunpack.c.h.b16 %v1427
    %v2206 = vunpack.c.l.b16 %v1428
    %v2207 = vunpack.c.h.b16 %v1428
    %v2208 = vunpack.c.l.b16 %v1429
    %v2209 = vunpack.c.h.b16 %v1429
    %v2210 = vunpack.c.l.b16 %v1430
    %v2211 = vunpack.c.h.b16 %v1430
    %v2212 = vunpack.c.l.b16 %v1431
    %v2213 = vunpack.c.h.b16 %v1431
    %v2214 = vunpack.c.l.b16 %v1432
    %v2215 = vunpack.c.h.b16 %v1432
    %v2216 = vunpack.c.l.b16 %v1433
    %v2217 = vunpack.c.h.b16 %v1433
    %v2218 = vunpack.c.l.b16 %v1434
    %v2219 = vunpack.c.h.b16 %v1434
    %v2220 = vunpack.c.l.b16 %v1435
    %v2221 = vunpack.c.h.b16 %v1435
    %v2222 = vunpack.c.l.b16 %v1436
    %v2223 = vunpack.c.h.b16 %v1436
    %v2224 = vunpack.c.l.b16 %v1437
    %v2225 = vunpack.c.h.b16 %v1437
    %v2226 = vunpack.c.l.b16 %v1438
    %v2227 = vunpack.c.h.b16 %v1438
    %v2228 = vunpack.c.l.b16 %v1439
    %v2229 = vunpack.c.h.b16 %v1439
    %v2230 = vunpack.c.l.b16 %v1440
    %v2231 = vunpack.c.h.b16 %v1440
    %v2232 = vunpack.c.l.b16 %v1441
    %v2233 = vunpack.c.h.b16 %v1441
    %v2234 = vunpack.c.l.b16 %v1442
    %v2235 = vunpack.c.h.b16 %v1442
    %v2236 = vunpack.c.l.b16 %v1443
    %v2237 = vunpack.c.h.b16 %v1443
    %v2238 = vunpack.c.l.b16 %v1444
    %v2239 = vunpack.c.h.b16 %v1444
    %v2240 = vunpack.c.l.b16 %v1445
    %v2241 = vunpack.c.h.b16 %v1445
    %v2242 = vunpack.c.l.b16 %v1446
    %v2243 = vunpack.c.h.b16 %v1446
    %v2244 = vunpack.c.l.b16 %v1447
    %v2245 = vunpack.c.h.b16 %v1447
    %v2246 = vunpack.c.l.b16 %v1448
    %v2247 = vunpack.c.h.b16 %v1448
    %v2248 = vunpack.c.l.b16 %v1449
    %v2249 = vunpack.c.h.b16 %v1449
    %v2250 = vunpack.c.l.b16 %v1450
    %v2251 = vunpack.c.h.b16 %v1450
    %v2252 = vunpack.c.l.b16 %v1451
    %v2253 = vunpack.c.h.b16 %v1451
    %v2254 = vunpack.c.l.b16 %v1452
    %v2255 = vunpack.c.h.b16 %v1452
    %v2256 = vunpack.c.l.b16 %v1453
    %v2257 = vunpack.c.h.b16 %v1453
    %v2258 = vunpack.c.l.b16 %v1454
    %v2259 = vunpack.c.h.b16 %v1454
    %v2260 = vunpack.c.l.b16 %v1455
    %v2261 = vunpack.c.h.b16 %v1455
    %v2262 = vunpack.c.l.b16 %v1456
    %v2263 = vunpack.c.h.b16 %v1456
    %v2264 = vunpack.c.l.b16 %v1457
    %v2265 = vunpack.c.h.b16 %v1457
    %v2266 = vunpack.c.l.b16 %v1458
    %v2267 = vunpack.c.h.b16 %v1458
    %v2268 = vunpack.c.l.b16 %v1459
    %v2269 = vunpack.c.h.b16 %v1459
    %v2270 = vpack.c.b16 %v1766, %v1758
    %v2271 = vpack.c.b16 %v1767, %v1759
    %v2272 = vpack.c.b16 %v1768, %v1760
    %v2273 = vpack.c.b16 %v1769, %v1761
    %v2274 = vpack.c.b16 %v1770, %v1762
    %v2275 = vpack.c.b16 %v1771, %v1763
    %v2276 = vpack.c.b16 %v1772, %v1764
    %v2277 = vpack.c.b16 %v1773, %v1765
    %v2278 = vpack.c.b16 %v1782, %v1774
    %v2279 = vpack.c.b16 %v1783, %v1775
    %v2280 = vpack.c.b16 %v1784, %v1776
    %v2281 = vpack.c.b16 %v1785, %v1777
    %v2282 = vpack.c.b16 %v1786, %v1778
    %v2283 = vpack.c.b16 %v1787, %v1779
    %v2284 = vpack.c.b16 %v1788, %v1780
    %v2285 = vpack.c.b16 %v1789, %v1781
    %v2286 = vpack.c.b16 %v1798, %v1790
    %v2287 = vpack.c.b16 %v1799, %v1791
    %v2288 = vpack.c.b16 %v1800, %v1792
    %v2289 = vpack.c.b16 %v1801, %v1793
    %v2290 = vpack.c.b16 %v1802, %v1794
    %v2291 = vpack.c.b16 %v1803, %v1795
    %v2292 = vpack.c.b16 %v1804, %v1796
    %v2293 = vpack.c.b16 %v1805, %v1797
    %v2294 = vpack.c.b16 %v1814, %v1806
    %v2295 = vpack.c.b16 %v1815, %v1807
    %v2296 = vpack.c.b16 %v1816, %v1808
    %v2297 = vpack.c.b16 %v1817, %v1809
    %v2298 = vpack.c.b16 %v1818, %v1810
    %v2299 = vpack.c.b16 %v1819, %v1811
    %v2300 = vpack.c.b16 %v1820, %v1812
    %v2301 = vpack.c.b16 %v1821, %v1813
    %v2302 = vpack.c.b16 %v1830, %v1822
    %v2303 = vpack.c.b16 %v1831, %v1823
    %v2304 = vpack.c.b16 %v1832, %v1824
    %v2305 = vpack.c.b16 %v1833, %v1825
    %v2306 = vpack.c.b16 %v1834, %v1826
    %v2307 = vpack.c.b16 %v1835, %v1827
    %v2308 = vpack.c.b16 %v1836, %v1828
    %v2309 = vpack.c.b16 %v1837, %v1829
    %v2310 = vpack.c.b16 %v1846, %v1838
    %v2311 = vpack.c.b16 %v1847, %v1839
    %v2312 = vpack.c.b16 %v1848, %v1840
    %v2313 = vpack.c.b16 %v1849, %v1841
    %v2314 = vpack.c.b16 %v1850, %v1842
    %v2315 = vpack.c.b16 %v1851, %v1843
    %v2316 = vpack.c.b16 %v1852, %v1844
    %v2317 = vpack.c.b16 %v1853, %v1845
    %v2318 = vpack.c.b16 %v1862, %v1854
    %v2319 = vpack.c.b16 %v1863, %v1855
    %v2320 = vpack.c.b16 %v1864, %v1856
    %v2321 = vpack.c.b16 %v1865, %v1857
    %v2322 = vpack.c.b16 %v1866, %v1858
    %v2323 = vpack.c.b16 %v1867, %v1859
    %v2324 = vpack.c.b16 %v1868, %v1860
    %v2325 = vpack.c.b16 %v1869, %v1861
    %v2326 = vpack.c.b16 %v1878, %v1870
    %v2327 = vpack.c.b16 %v1879, %v1871
    %v2328 = vpack.c.b16 %v1880, %v1872
    %v2329 = vpack.c.b16 %v1881, %v1873
    %v2330 = vpack.c.b16 %v1882, %v1874
    %v2331 = vpack.c.b16 %v1883, %v1875
    %v2332 = vpack.c.b16 %v1884, %v1876
    %v2333 = vpack.c.b16 %v1885, %v1877
    %v2334 = vpack.c.b16 %v1894, %v1886
    %v2335 = vpack.c.b16 %v1895, %v1887
    %v2336 = vpack.c.b16 %v1896, %v1888
    %v2337 = vpack.c.b16 %v1897, %v1889
    %v2338 = vpack.c.b16 %v1898, %v1890
    %v2339 = vpack.c.b16 %v1899, %v1891
    %v2340 = vpack.c.b16 %v1900, %v1892
    %v2341 = vpack.c.b16 %v1901, %v1893
    %v2342 = vpack.c.b16 %v1910, %v1902
    %v2343 = vpack.c.b16 %v1911, %v1903
    %v2344 = vpack.c.b16 %v1912, %v1904
    %v2345 = vpack.c.b16 %v1913, %v1905
    %v2346 = vpack.c.b16 %v1914, %v1906
    %v2347 = vpack.c.b16 %v1915, %v1907
    %v2348 = vpack.c.b16 %v1916, %v1908
    %v2349 = vpack.c.b16 %v1917, %v1909
    %v2350 = vpack.c.b16 %v1926, %v1918
    %v2351 = vpack.c.b16 %v1927, %v1919
    %v2352 = vpack.c.b16 %v1928, %v1920
    %v2353 = vpack.c.b16 %v1929, %v1921
    %v2354 = vpack.c.b16 %v1930, %v1922
    %v2355 = vpack.c.b16 %v1931, %v1923
    %v2356 = vpack.c.b16 %v1932, %v1924
    %v2357 = vpack.c.b16 %v1933, %v1925
    %v2358 = vpack.c.b16 %v1942, %v1934
    %v2359 = vpack.c.b16 %v1943, %v1935
    %v2360 = vpack.c.b16 %v1944, %v1936
    %v2361 = vpack.c.b16 %v1945, %v1937
    %v2362 = vpack.c.b16 %v1946, %v1938
    %v2363 = vpack.c.b16 %v1947, %v1939
    %v2364 = vpack.c.b16 %v1948, %v1940
    %v2365 = vpack.c.b16 %v1949, %v1941
    %v2366 = vpack.c.b16 %v1958, %v1950
    %v2367 = vpack.c.b16 %v1959, %v1951
    %v2368 = vpack.c.b16 %v1960, %v1952
    %v2369 = vpack.c.b16 %v1961, %v1953
    %v2370 = vpack.c.b16 %v1962, %v1954
    %v2371 = vpack.c.b16 %v1963, %v1955
    %v2372 = vpack.c.b16 %v1964, %v1956
    %v2373 = vpack.c.b16 %v1965, %v1957
    %v2374 = vpack.c.b16 %v1974, %v1966
    %v2375 = vpack.c.b16 %v1975, %v1967
    %v2376 = vpack.c.b16 %v1976, %v1968
    %v2377 = vpack.c.b16 %v1977, %v1969
    %v2378 = vpack.c.b16 %v1978, %v1970
    %v2379 = vpack.c.b16 %v1979, %v1971
    %v2380 = vpack.c.b16 %v1980, %v1972
    %v2381 = vpack.c.b16 %v1981, %v1973
    %v2382 = vpack.c.b16 %v1990, %v1982
    %v2383 = vpack.c.b16 %v1991, %v1983
    %v2384 = vpack.c.b16 %v1992, %v1984
    %v2385 = vpack.c.b16 %v1993, %v1985
    %v2386 = vpack.c.b16 %v1994, %v1986
    %v2387 = vpack.c.b16 %v1995, %v1987
    %v2388 = vpack.c.b16 %v1996, %v1988
    %v2389 = vpack.c.b16 %v1997, %v1989
    %v2390 = vpack.c.b16 %v2006, %v1998
    %v2391 = vpack.c.b16 %v2007, %v1999
    %v2392 = vpack.c.b16 %v2008, %v2000
    %v2393 = vpack.c.b16 %v2009, %v2001
    %v2394 = vpack.c.b16 %v2010, %v2002
    %v2395 = vpack.c.b16 %v2011, %v2003
    %v2396 = vpack.c.b16 %v2012, %v2004
    %v2397 = vpack.c.b16 %v2013, %v2005
    %v2398 = vpack.c.b16 %v2022, %v2014
    %v2399 = vpack.c.b16 %v2023, %v2015
    %v2400 = vpack.c.b16 %v2024, %v2016
    %v2401 = vpack.c.b16 %v2025, %v2017
    %v2402 = vpack.c.b16 %v2026, %v2018
    %v2403 = vpack.c.b16 %v2027, %v2019
    %v2404 = vpack.c.b16 %v2028, %v2020
    %v2405 = vpack.c.b16 %v2029, %v2021
    %v2406 = vpack.c.b16 %v2038, %v2030
    %v2407 = vpack.c.b16 %v2039, %v2031
    %v2408 = vpack.c.b16 %v2040, %v2032
    %v2409 = vpack.c.b16 %v2041, %v2033
    %v2410 = vpack.c.b16 %v2042, %v2034
    %v2411 = vpack.c.b16 %v2043, %v2035
    %v2412 = vpack.c.b16 %v2044, %v2036
    %v2413 = vpack.c.b16 %v2045, %v2037
    %v2414 = vpack.c.b16 %v2054, %v2046
    %v2415 = vpack.c.b16 %v2055, %v2047
    %v2416 = vpack.c.b16 %v2056, %v2048
    %v2417 = vpack.c.b16 %v2057, %v2049
    %v2418 = vpack.c.b16 %v2058, %v2050
    %v2419 = vpack.c.b16 %v2059, %v2051
    %v2420 = vpack.c.b16 %v2060, %v2052
    %v2421 = vpack.c.b16 %v2061, %v2053
    %v2422 = vpack.c.b16 %v2070, %v2062
    %v2423 = vpack.c.b16 %v2071, %v2063
    %v2424 = vpack.c.b16 %v2072, %v2064
    %v2425 = vpack.c.b16 %v2073, %v2065
    %v2426 = vpack.c.b16 %v2074, %v2066
    %v2427 = vpack.c.b16 %v2075, %v2067
    %v2428 = vpack.c.b16 %v2076, %v2068
    %v2429 = vpack.c.b16 %v2077, %v2069
    %v2430 = vpack.c.b16 %v2086, %v2078
    %v2431 = vpack.c.b16 %v2087, %v2079
    %v2432 = vpack.c.b16 %v2088, %v2080
    %v2433 = vpack.c.b16 %v2089, %v2081
    %v2434 = vpack.c.b16 %v2090, %v2082
    %v2435 = vpack.c.b16 %v2091, %v2083
    %v2436 = vpack.c.b16 %v2092, %v2084
    %v2437 = vpack.c.b16 %v2093, %v2085
    %v2438 = vpack.c.b16 %v2102, %v2094
    %v2439 = vpack.c.b16 %v2103, %v2095
    %v2440 = vpack.c.b16 %v2104, %v2096
    %v2441 = vpack.c.b16 %v2105, %v2097
    %v2442 = vpack.c.b16 %v2106, %v2098
    %v2443 = vpack.c.b16 %v2107, %v2099
    %v2444 = vpack.c.b16 %v2108, %v2100
    %v2445 = vpack.c.b16 %v2109, %v2101
    %v2446 = vpack.c.b16 %v2118, %v2110
    %v2447 = vpack.c.b16 %v2119, %v2111
    %v2448 = vpack.c.b16 %v2120, %v2112
    %v2449 = vpack.c.b16 %v2121, %v2113
    %v2450 = vpack.c.b16 %v2122, %v2114
    %v2451 = vpack.c.b16 %v2123, %v2115
    %v2452 = vpack.c.b16 %v2124, %v2116
    %v2453 = vpack.c.b16 %v2125, %v2117
    %v2454 = vpack.c.b16 %v2134, %v2126
    %v2455 = vpack.c.b16 %v2135, %v2127
    %v2456 = vpack.c.b16 %v2136, %v2128
    %v2457 = vpack.c.b16 %v2137, %v2129
    %v2458 = vpack.c.b16 %v2138, %v2130
    %v2459 = vpack.c.b16 %v2139, %v2131
    %v2460 = vpack.c.b16 %v2140, %v2132
    %v2461 = vpack.c.b16 %v2141, %v2133
    %v2462 = vpack.c.b16 %v2150, %v2142
    %v2463 = vpack.c.b16 %v2151, %v2143
    %v2464 = vpack.c.b16 %v2152, %v2144
    %v2465 = vpack.c.b16 %v2153, %v2145
    %v2466 = vpack.c.b16 %v2154, %v2146
    %v2467 = vpack.c.b16 %v2155, %v2147
    %v2468 = vpack.c.b16 %v2156, %v2148
    %v2469 = vpack.c.b16 %v2157, %v2149
    %v2470 = vpack.c.b16 %v2166, %v2158
    %v2471 = vpack.c.b16 %v2167, %v2159
    %v2472 = vpack.c.b16 %v2168, %v2160
    %v2473 = vpack.c.b16 %v2169, %v2161
    %v2474 = vpack.c.b16 %v2170, %v2162
    %v2475 = vpack.c.b16 %v2171, %v2163
    %v2476 = vpack.c.b16 %v2172, %v2164
    %v2477 = vpack.c.b16 %v2173, %v2165
    %v2478 = vpack.c.b16 %v2182, %v2174
    %v2479 = vpack.c.b16 %v2183, %v2175
    %v2480 = vpack.c.b16 %v2184, %v2176
    %v2481 = vpack.c.b16 %v2185, %v2177
    %v2482 = vpack.c.b16 %v2186, %v2178
    %v2483 = vpack.c.b16 %v2187, %v2179
    %v2484 = vpack.c.b16 %v2188, %v2180
    %v2485 = vpack.c.b16 %v2189, %v2181
    %v2486 = vpack.c.b16 %v2198, %v2190
    %v2487 = vpack.c.b16 %v2199, %v2191
    %v2488 = vpack.c.b16 %v2200, %v2192
    %v2489 = vpack.c.b16 %v2201, %v2193
    %v2490 = vpack.c.b16 %v2202, %v2194
    %v2491 = vpack.c.b16 %v2203, %v2195
    %v2492 = vpack.c.b16 %v2204, %v2196
    %v2493 = vpack.c.b16 %v2205, %v2197
    %v2494 = vpack.c.b16 %v2214, %v2206
    %v2495 = vpack.c.b16 %v2215, %v2207
    %v2496 = vpack.c.b16 %v2216, %v2208
    %v2497 = vpack.c.b16 %v2217, %v2209
    %v2498 = vpack.c.b16 %v2218, %v2210
    %v2499 = vpack.c.b16 %v2219, %v2211
    %v2500 = vpack.c.b16 %v2220, %v2212
    %v2501 = vpack.c.b16 %v2221, %v2213
    %v2502 = vpack.c.b16 %v2230, %v2222
    %v2503 = vpack.c.b16 %v2231, %v2223
    %v2504 = vpack.c.b16 %v2232, %v2224
    %v2505 = vpack.c.b16 %v2233, %v2225
    %v2506 = vpack.c.b16 %v2234, %v2226
    %v2507 = vpack.c.b16 %v2235, %v2227
    %v2508 = vpack.c.b16 %v2236, %v2228
    %v2509 = vpack.c.b16 %v2237, %v2229
    %v2510 = vpack.c.b16 %v2246, %v2238
    %v2511 = vpack.c.b16 %v2247, %v2239
    %v2512 = vpack.c.b16 %v2248, %v2240
    %v2513 = vpack.c.b16 %v2249, %v2241
    %v2514 = vpack.c.b16 %v2250, %v2242
    %v2515 = vpack.c.b16 %v2251, %v2243
    %v2516 = vpack.c.b16 %v2252, %v2244
    %v2517 = vpack.c.b16 %v2253, %v2245
    %v2518 = vpack.c.b16 %v2262, %v2254
    %v2519 = vpack.c.b16 %v2263, %v2255
    %v2520 = vpack.c.b16 %v2264, %v2256
    %v2521 = vpack.c.b16 %v2265, %v2257
    %v2522 = vpack.c.b16 %v2266, %v2258
    %v2523 = vpack.c.b16 %v2267, %v2259
    %v2524 = vpack.c.b16 %v2268, %v2260
    %v2525 = vpack.c.b16 %v2269, %v2261
    %2782 = vmatprep.subr.bf16.mxu0 %v2271
    %2783 = vmatpush1.bf16.msra.mxu0 %v2270
    %2784 = vmatprep.subr.bf16.mxu0 %v2279
    %2785 = vmatpush1.bf16.msra.mxu0 %v2278
    %2786 = vmatprep.subr.bf16.mxu0 %v2287
    %2787 = vmatpush1.bf16.msra.mxu0 %v2286
    %2788 = vmatprep.subr.bf16.mxu0 %v2295
    %2789 = vmatpush1.bf16.msra.mxu0 %v2294
    %2790 = vmatprep.subr.bf16.mxu0 %v2303
    %2791 = vmatpush1.bf16.msra.mxu0 %v2302
    %2792 = vmatprep.subr.bf16.mxu0 %v2311
    %2793 = vmatpush1.bf16.msra.mxu0 %v2310
    %2794 = vmatprep.subr.bf16.mxu0 %v2319
    %2795 = vmatpush1.bf16.msra.mxu0 %v2318
    %2796 = vmatprep.subr.bf16.mxu0 %v2327
    %2797 = vmatpush1.bf16.msra.mxu0 %v2326
    %2798 = vmatprep.subr.bf16.mxu0 %v2335
    %2799 = vmatpush1.bf16.msra.mxu0 %v2334
    %2800 = vmatprep.subr.bf16.mxu0 %v2343
    %2801 = vmatpush1.bf16.msra.mxu0 %v2342
    %2802 = vmatprep.subr.bf16.mxu0 %v2351
    %2803 = vmatpush1.bf16.msra.mxu0 %v2350
    %2804 = vmatprep.subr.bf16.mxu0 %v2359
    %2805 = vmatpush1.bf16.msra.mxu0 %v2358
    %2806 = vmatprep.subr.bf16.mxu0 %v2367
    %2807 = vmatpush1.bf16.msra.mxu0 %v2366
    %2808 = vmatprep.subr.bf16.mxu0 %v2375
    %2809 = vmatpush1.bf16.msra.mxu0 %v2374
    %2810 = vmatprep.subr.bf16.mxu0 %v2383
    %2811 = vmatpush1.bf16.msra.mxu0 %v2382
    %2812 = vmatprep.subr.bf16.mxu0 %v2391
    %2813 = vmatpush1.bf16.msra.mxu0 %v2390
    %2814 = vmatprep.mubr.bf16.mxu0 %v1201
    %2815 = vmatmul.mubr.bf16.gmra.mrb[0].mxu0 %v1200
    %v2816 = vpop.f32.mrb[0].mxu0
    %v2817 = vadd.f32 %v1465, %v2816
    %v2818 = vpop.f32.mrb[0].mxu0
    %v2819 = vadd.f32 %v1469, %v2818
    %v2820 = vpop.f32.mrb[0].mxu0
    %v2821 = vpop.f32.mrb[0].mxu0
    %2822 = vdwg.mxu0
    %2823 = vmatprep.subr.bf16.mxu0 %v2399
    %2824 = vmatpush1.bf16.msra.mxu0 %v2398
    %2825 = vmatprep.subr.bf16.mxu0 %v2407
    %2826 = vmatpush1.bf16.msra.mxu0 %v2406
    %2827 = vmatprep.subr.bf16.mxu0 %v2415
    %2828 = vmatpush1.bf16.msra.mxu0 %v2414
    %2829 = vmatprep.subr.bf16.mxu0 %v2423
    %2830 = vmatpush1.bf16.msra.mxu0 %v2422
    %2831 = vmatprep.subr.bf16.mxu0 %v2431
    %2832 = vmatpush1.bf16.msra.mxu0 %v2430
    %2833 = vmatprep.subr.bf16.mxu0 %v2439
    %2834 = vmatpush1.bf16.msra.mxu0 %v2438
    %2835 = vmatprep.subr.bf16.mxu0 %v2447
    %2836 = vmatpush1.bf16.msra.mxu0 %v2446
    %2837 = vmatprep.subr.bf16.mxu0 %v2455
    %2838 = vmatpush1.bf16.msra.mxu0 %v2454
    %2839 = vmatprep.subr.bf16.mxu0 %v2463
    %2840 = vmatpush1.bf16.msra.mxu0 %v2462
    %2841 = vmatprep.subr.bf16.mxu0 %v2471
    %2842 = vmatpush1.bf16.msra.mxu0 %v2470
    %2843 = vmatprep.subr.bf16.mxu0 %v2479
    %2844 = vmatpush1.bf16.msra.mxu0 %v2478
    %2845 = vmatprep.subr.bf16.mxu0 %v2487
    %2846 = vmatpush1.bf16.msra.mxu0 %v2486
    %2847 = vmatprep.subr.bf16.mxu0 %v2495
    %2848 = vmatpush1.bf16.msra.mxu0 %v2494
    %2849 = vmatprep.subr.bf16.mxu0 %v2503
    %2850 = vmatpush1.bf16.msra.mxu0 %v2502
    %2851 = vmatprep.subr.bf16.mxu0 %v2511
    %2852 = vmatpush1.bf16.msra.mxu0 %v2510
    %2853 = vmatprep.subr.bf16.mxu0 %v2519
    %2854 = vmatpush1.bf16.msra.mxu0 %v2518
    %2855 = vmatprep.mubr.bf16.mxu0 %v1203
    %2856 = vmatmul.mubr.bf16.gmra.mrb[0].mxu0 %v1202
    %v2857 = vpop.f32.mrb[0].mxu0
    %v2858 = vadd.f32 %v2817, %v2857
    %v2859 = vpop.f32.mrb[0].mxu0
    %v2860 = vadd.f32 %v2819, %v2859
    %v2861 = vpop.f32.mrb[0].mxu0
    %v2862 = vpop.f32.mrb[0].mxu0
    %2863 = vdwg.mxu0
    %2864 = vmatprep.subr.bf16.mxu0 %v2273
    %2865 = vmatpush1.bf16.msra.mxu0 %v2272
    %2866 = vmatprep.subr.bf16.mxu0 %v2281
    %2867 = vmatpush1.bf16.msra.mxu0 %v2280
    %2868 = vmatprep.subr.bf16.mxu0 %v2289
    %2869 = vmatpush1.bf16.msra.mxu0 %v2288
    %2870 = vmatprep.subr.bf16.mxu0 %v2297
    %2871 = vmatpush1.bf16.msra.mxu0 %v2296
    %2872 = vmatprep.subr.bf16.mxu0 %v2305
    %2873 = vmatpush1.bf16.msra.mxu0 %v2304
    %2874 = vmatprep.subr.bf16.mxu0 %v2313
    %2875 = vmatpush1.bf16.msra.mxu0 %v2312
    %2876 = vmatprep.subr.bf16.mxu0 %v2321
    %2877 = vmatpush1.bf16.msra.mxu0 %v2320
    %2878 = vmatprep.subr.bf16.mxu0 %v2329
    %2879 = vmatpush1.bf16.msra.mxu0 %v2328
    %2880 = vmatprep.subr.bf16.mxu0 %v2337
    %2881 = vmatpush1.bf16.msra.mxu0 %v2336
    %2882 = vmatprep.subr.bf16.mxu0 %v2345
    %2883 = vmatpush1.bf16.msra.mxu0 %v2344
    %2884 = vmatprep.subr.bf16.mxu0 %v2353
    %2885 = vmatpush1.bf16.msra.mxu0 %v2352
    %2886 = vmatprep.subr.bf16.mxu0 %v2361
    %2887 = vmatpush1.bf16.msra.mxu0 %v2360
    %2888 = vmatprep.subr.bf16.mxu0 %v2369
    %2889 = vmatpush1.bf16.msra.mxu0 %v2368
    %2890 = vmatprep.subr.bf16.mxu0 %v2377
    %2891 = vmatpush1.bf16.msra.mxu0 %v2376
    %2892 = vmatprep.subr.bf16.mxu0 %v2385
    %2893 = vmatpush1.bf16.msra.mxu0 %v2384
    %2894 = vmatprep.subr.bf16.mxu0 %v2393
    %2895 = vmatpush1.bf16.msra.mxu0 %v2392
    %2896 = vmatprep.mubr.bf16.mxu0 %v1201
    %2897 = vmatmul.mubr.bf16.gmra.mrb[0].mxu0 %v1200
    %v2898 = vpop.f32.mrb[0].mxu0
    %v2899 = vadd.f32 %v1473, %v2898
    %v2900 = vpop.f32.mrb[0].mxu0
    %v2901 = vadd.f32 %v1477, %v2900
    %v2902 = vpop.f32.mrb[0].mxu0
    %v2903 = vpop.f32.mrb[0].mxu0
    %2904 = vdwg.mxu0
    %2905 = vmatprep.subr.bf16.mxu0 %v2401
    %2906 = vmatpush1.bf16.msra.mxu0 %v2400
    %2907 = vmatprep.subr.bf16.mxu0 %v2409
    %2908 = vmatpush1.bf16.msra.mxu0 %v2408
    %2909 = vmatprep.subr.bf16.mxu0 %v2417
    %2910 = vmatpush1.bf16.msra.mxu0 %v2416
    %2911 = vmatprep.subr.bf16.mxu0 %v2425
    %2912 = vmatpush1.bf16.msra.mxu0 %v2424
    %2913 = vmatprep.subr.bf16.mxu0 %v2433
    %2914 = vmatpush1.bf16.msra.mxu0 %v2432
    %2915 = vmatprep.subr.bf16.mxu0 %v2441
    %2916 = vmatpush1.bf16.msra.mxu0 %v2440
    %2917 = vmatprep.subr.bf16.mxu0 %v2449
    %2918 = vmatpush1.bf16.msra.mxu0 %v2448
    %2919 = vmatprep.subr.bf16.mxu0 %v2457
    %2920 = vmatpush1.bf16.msra.mxu0 %v2456
    %2921 = vmatprep.subr.bf16.mxu0 %v2465
    %2922 = vmatpush1.bf16.msra.mxu0 %v2464
    %2923 = vmatprep.subr.bf16.mxu0 %v2473
    %2924 = vmatpush1.bf16.msra.mxu0 %v2472
    %2925 = vmatprep.subr.bf16.mxu0 %v2481
    %2926 = vmatpush1.bf16.msra.mxu0 %v2480
    %2927 = vmatprep.subr.bf16.mxu0 %v2489
    %2928 = vmatpush1.bf16.msra.mxu0 %v2488
    %2929 = vmatprep.subr.bf16.mxu0 %v2497
    %2930 = vmatpush1.bf16.msra.mxu0 %v2496
    %2931 = vmatprep.subr.bf16.mxu0 %v2505
    %2932 = vmatpush1.bf16.msra.mxu0 %v2504
    %2933 = vmatprep.subr.bf16.mxu0 %v2513
    %2934 = vmatpush1.bf16.msra.mxu0 %v2512
    %2935 = vmatprep.subr.bf16.mxu0 %v2521
    %2936 = vmatpush1.bf16.msra.mxu0 %v2520
    %2937 = vmatprep.mubr.bf16.mxu0 %v1203
    %2938 = vmatmul.mubr.bf16.gmra.mrb[0].mxu0 %v1202
    %v2939 = vpop.f32.mrb[0].mxu0
    %v2940 = vadd.f32 %v2899, %v2939
    %v2941 = vpop.f32.mrb[0].mxu0
    %v2942 = vadd.f32 %v2901, %v2941
    %v2943 = vpop.f32.mrb[0].mxu0
    %v2944 = vpop.f32.mrb[0].mxu0
    %2945 = vdwg.mxu0
    %2946 = vmatprep.subr.bf16.mxu0 %v2275
    %2947 = vmatpush1.bf16.msra.mxu0 %v2274
    %2948 = vmatprep.subr.bf16.mxu0 %v2283
    %2949 = vmatpush1.bf16.msra.mxu0 %v2282
    %2950 = vmatprep.subr.bf16.mxu0 %v2291
    %2951 = vmatpush1.bf16.msra.mxu0 %v2290
    %2952 = vmatprep.subr.bf16.mxu0 %v2299
    %2953 = vmatpush1.bf16.msra.mxu0 %v2298
    %2954 = vmatprep.subr.bf16.mxu0 %v2307
    %2955 = vmatpush1.bf16.msra.mxu0 %v2306
    %2956 = vmatprep.subr.bf16.mxu0 %v2315
    %2957 = vmatpush1.bf16.msra.mxu0 %v2314
    %2958 = vmatprep.subr.bf16.mxu0 %v2323
    %2959 = vmatpush1.bf16.msra.mxu0 %v2322
    %2960 = vmatprep.subr.bf16.mxu0 %v2331
    %2961 = vmatpush1.bf16.msra.mxu0 %v2330
    %2962 = vmatprep.subr.bf16.mxu0 %v2339
    %2963 = vmatpush1.bf16.msra.mxu0 %v2338
    %2964 = vmatprep.subr.bf16.mxu0 %v2347
    %2965 = vmatpush1.bf16.msra.mxu0 %v2346
    %2966 = vmatprep.subr.bf16.mxu0 %v2355
    %2967 = vmatpush1.bf16.msra.mxu0 %v2354
    %2968 = vmatprep.subr.bf16.mxu0 %v2363
    %2969 = vmatpush1.bf16.msra.mxu0 %v2362
    %2970 = vmatprep.subr.bf16.mxu0 %v2371
    %2971 = vmatpush1.bf16.msra.mxu0 %v2370
    %2972 = vmatprep.subr.bf16.mxu0 %v2379
    %2973 = vmatpush1.bf16.msra.mxu0 %v2378
    %2974 = vmatprep.subr.bf16.mxu0 %v2387
    %2975 = vmatpush1.bf16.msra.mxu0 %v2386
    %2976 = vmatprep.subr.bf16.mxu0 %v2395
    %2977 = vmatpush1.bf16.msra.mxu0 %v2394
    %2978 = vmatprep.mubr.bf16.mxu0 %v1201
    %2979 = vmatmul.mubr.bf16.gmra.mrb[0].mxu0 %v1200
    %v2980 = vpop.f32.mrb[0].mxu0
    %v2981 = vadd.f32 %v1481, %v2980
    %v2982 = vpop.f32.mrb[0].mxu0
    %v2983 = vadd.f32 %v1485, %v2982
    %v2984 = vpop.f32.mrb[0].mxu0
    %v2985 = vpop.f32.mrb[0].mxu0
    %2986 = vdwg.mxu0
    %2987 = vmatprep.subr.bf16.mxu0 %v2403
    %2988 = vmatpush1.bf16.msra.mxu0 %v2402
    %2989 = vmatprep.subr.bf16.mxu0 %v2411
    %2990 = vmatpush1.bf16.msra.mxu0 %v2410
    %2991 = vmatprep.subr.bf16.mxu0 %v2419
    %2992 = vmatpush1.bf16.msra.mxu0 %v2418
    %2993 = vmatprep.subr.bf16.mxu0 %v2427
    %2994 = vmatpush1.bf16.msra.mxu0 %v2426
    %2995 = vmatprep.subr.bf16.mxu0 %v2435
    %2996 = vmatpush1.bf16.msra.mxu0 %v2434
    %2997 = vmatprep.subr.bf16.mxu0 %v2443
    %2998 = vmatpush1.bf16.msra.mxu0 %v2442
    %2999 = vmatprep.subr.bf16.mxu0 %v2451
    %3000 = vmatpush1.bf16.msra.mxu0 %v2450
    %3001 = vmatprep.subr.bf16.mxu0 %v2459
    %3002 = vmatpush1.bf16.msra.mxu0 %v2458
    %3003 = vmatprep.subr.bf16.mxu0 %v2467
    %3004 = vmatpush1.bf16.msra.mxu0 %v2466
    %3005 = vmatprep.subr.bf16.mxu0 %v2475
    %3006 = vmatpush1.bf16.msra.mxu0 %v2474
    %3007 = vmatprep.subr.bf16.mxu0 %v2483
    %3008 = vmatpush1.bf16.msra.mxu0 %v2482
    %3009 = vmatprep.subr.bf16.mxu0 %v2491
    %3010 = vmatpush1.bf16.msra.mxu0 %v2490
    %3011 = vmatprep.subr.bf16.mxu0 %v2499
    %3012 = vmatpush1.bf16.msra.mxu0 %v2498
    %3013 = vmatprep.subr.bf16.mxu0 %v2507
    %3014 = vmatpush1.bf16.msra.mxu0 %v2506
    %3015 = vmatprep.subr.bf16.mxu0 %v2515
    %3016 = vmatpush1.bf16.msra.mxu0 %v2514
    %3017 = vmatprep.subr.bf16.mxu0 %v2523
    %3018 = vmatpush1.bf16.msra.mxu0 %v2522
    %3019 = vmatprep.mubr.bf16.mxu0 %v1203
    %3020 = vmatmul.mubr.bf16.gmra.mrb[0].mxu0 %v1202
    %v3021 = vpop.f32.mrb[0].mxu0
    %v3022 = vadd.f32 %v2981, %v3021
    %v3023 = vpop.f32.mrb[0].mxu0
    %v3024 = vadd.f32 %v2983, %v3023
    %v3025 = vpop.f32.mrb[0].mxu0
    %v3026 = vpop.f32.mrb[0].mxu0
    %3027 = vdwg.mxu0
    %3028 = vmatprep.subr.bf16.mxu0 %v2277
    %3029 = vmatpush1.bf16.msra.mxu0 %v2276
    %3030 = vmatprep.subr.bf16.mxu0 %v2285
    %3031 = vmatpush1.bf16.msra.mxu0 %v2284
    %3032 = vmatprep.subr.bf16.mxu0 %v2293
    %3033 = vmatpush1.bf16.msra.mxu0 %v2292
    %3034 = vmatprep.subr.bf16.mxu0 %v2301
    %3035 = vmatpush1.bf16.msra.mxu0 %v2300
    %3036 = vmatprep.subr.bf16.mxu0 %v2309
    %3037 = vmatpush1.bf16.msra.mxu0 %v2308
    %3038 = vmatprep.subr.bf16.mxu0 %v2317
    %3039 = vmatpush1.bf16.msra.mxu0 %v2316
    %3040 = vmatprep.subr.bf16.mxu0 %v2325
    %3041 = vmatpush1.bf16.msra.mxu0 %v2324
    %3042 = vmatprep.subr.bf16.mxu0 %v2333
    %3043 = vmatpush1.bf16.msra.mxu0 %v2332
    %3044 = vmatprep.subr.bf16.mxu0 %v2341
    %3045 = vmatpush1.bf16.msra.mxu0 %v2340
    %3046 = vmatprep.subr.bf16.mxu0 %v2349
    %3047 = vmatpush1.bf16.msra.mxu0 %v2348
    %3048 = vmatprep.subr.bf16.mxu0 %v2357
    %3049 = vmatpush1.bf16.msra.mxu0 %v2356
    %3050 = vmatprep.subr.bf16.mxu0 %v2365
    %3051 = vmatpush1.bf16.msra.mxu0 %v2364
    %3052 = vmatprep.subr.bf16.mxu0 %v2373
    %3053 = vmatpush1.bf16.msra.mxu0 %v2372
    %3054 = vmatprep.subr.bf16.mxu0 %v2381
    %3055 = vmatpush1.bf16.msra.mxu0 %v2380
    %3056 = vmatprep.subr.bf16.mxu0 %v2389
    %3057 = vmatpush1.bf16.msra.mxu0 %v2388
    %3058 = vmatprep.subr.bf16.mxu0 %v2397
    %3059 = vmatpush1.bf16.msra.mxu0 %v2396
    %3060 = vmatprep.mubr.bf16.mxu0 %v1201
    %3061 = vmatmul.mubr.bf16.gmra.mrb[0].mxu0 %v1200
    %v3062 = vpop.f32.mrb[0].mxu0
    %v3063 = vadd.f32 %v1489, %v3062
    %v3064 = vpop.f32.mrb[0].mxu0
    %v3065 = vadd.f32 %v1493, %v3064
    %v3066 = vpop.f32.mrb[0].mxu0
    %v3067 = vpop.f32.mrb[0].mxu0
    %3068 = vdwg.mxu0
    %3069 = vmatprep.subr.bf16.mxu0 %v2405
    %3070 = vmatpush1.bf16.msra.mxu0 %v2404
    %3071 = vmatprep.subr.bf16.mxu0 %v2413
    %3072 = vmatpush1.bf16.msra.mxu0 %v2412
    %3073 = vmatprep.subr.bf16.mxu0 %v2421
    %3074 = vmatpush1.bf16.msra.mxu0 %v2420
    %3075 = vmatprep.subr.bf16.mxu0 %v2429
    %3076 = vmatpush1.bf16.msra.mxu0 %v2428
    %3077 = vmatprep.subr.bf16.mxu0 %v2437
    %3078 = vmatpush1.bf16.msra.mxu0 %v2436
    %3079 = vmatprep.subr.bf16.mxu0 %v2445
    %3080 = vmatpush1.bf16.msra.mxu0 %v2444
    %3081 = vmatprep.subr.bf16.mxu0 %v2453
    %3082 = vmatpush1.bf16.msra.mxu0 %v2452
    %3083 = vmatprep.subr.bf16.mxu0 %v2461
    %3084 = vmatpush1.bf16.msra.mxu0 %v2460
    %3085 = vmatprep.subr.bf16.mxu0 %v2469
    %3086 = vmatpush1.bf16.msra.mxu0 %v2468
    %3087 = vmatprep.subr.bf16.mxu0 %v2477
    %3088 = vmatpush1.bf16.msra.mxu0 %v2476
    %3089 = vmatprep.subr.bf16.mxu0 %v2485
    %3090 = vmatpush1.bf16.msra.mxu0 %v2484
    %3091 = vmatprep.subr.bf16.mxu0 %v2493
    %3092 = vmatpush1.bf16.msra.mxu0 %v2492
    %3093 = vmatprep.subr.bf16.mxu0 %v2501
    %3094 = vmatpush1.bf16.msra.mxu0 %v2500
    %3095 = vmatprep.subr.bf16.mxu0 %v2509
    %3096 = vmatpush1.bf16.msra.mxu0 %v2508
    %3097 = vmatprep.subr.bf16.mxu0 %v2517
    %3098 = vmatpush1.bf16.msra.mxu0 %v2516
    %3099 = vmatprep.subr.bf16.mxu0 %v2525
    %3100 = vmatpush1.bf16.msra.mxu0 %v2524
    %3101 = vmatprep.mubr.bf16.mxu0 %v1203
    %3102 = vmatmul.mubr.bf16.gmra.mrb[0].mxu0 %v1202
    %v3103 = vpop.f32.mrb[0].mxu0
    %v3104 = vadd.f32 %v3063, %v3103
    %v3105 = vpop.f32.mrb[0].mxu0
    %v3106 = vadd.f32 %v3065, %v3105
    %v3107 = vpop.f32.mrb[0].mxu0
    %v3108 = vpop.f32.mrb[0].mxu0
    %3109 = vdwg.mxu0
    %v3110 = vmax.f32 %v2858, 0.0
    %v3111 = vmax.f32 %v2860, 0.0
    %v3112 = vmax.f32 %v2940, 0.0
    %v3113 = vmax.f32 %v2942, 0.0
    %v3114 = vmax.f32 %v3022, 0.0
    %v3115 = vmax.f32 %v3024, 0.0
    %v3116 = vmax.f32 %v3104, 0.0
    %v3117 = vmax.f32 %v3106, 0.0
    %v3118 = vld [vmem:[#allocation8] sm:$0xff]
    %v3120 = vlaneseq
    %v3121 = vshrl.u32 %v3120, 7
    %v3122 = vsub.s32 0, %v3121
    %v3123 = vrot.slane %v3118, %v3122
    %v3124 = vlaneseq
    %v3125 = vshrl.u32 %v3124, 7
    %v3126 = vsub.s32 1, %v3125
    %v3127 = vrot.slane %v3118, %v3126
    %v3128 = vlaneseq
    %v3129 = vshrl.u32 %v3128, 7
    %v3130 = vsub.s32 2, %v3129
    %v3131 = vrot.slane %v3118, %v3130
    %v3132 = vlaneseq
    %v3133 = vshrl.u32 %v3132, 7
    %v3134 = vsub.s32 3, %v3133
    %v3135 = vrot.slane %v3118, %v3134
    %v3136 = vlaneseq
    %v3137 = vshrl.u32 %v3136, 7
    %v3138 = vsub.s32 4, %v3137
    %v3139 = vrot.slane %v3118, %v3138
    %v3140 = vlaneseq
    %v3141 = vshrl.u32 %v3140, 7
    %v3142 = vsub.s32 5, %v3141
    %v3143 = vrot.slane %v3118, %v3142
    %v3144 = vlaneseq
    %v3145 = vshrl.u32 %v3144, 7
    %v3146 = vsub.s32 6, %v3145
    %v3147 = vrot.slane %v3118, %v3146
    %v3148 = vlaneseq
    %v3149 = vshrl.u32 %v3148, 7
    %v3150 = vsub.s32 7, %v3149
    %v3151 = vrot.slane %v3118, %v3150
    %v3160 = vmul.f32 %v3110, %v3123
    %v3161 = vmul.f32 %v3111, %v3127
    %v3162 = vmul.f32 %v3112, %v3131
    %v3163 = vmul.f32 %v3113, %v3135
    %v3164 = vmul.f32 %v3114, %v3139
    %v3165 = vmul.f32 %v3115, %v3143
    %v3166 = vmul.f32 %v3116, %v3147
    %v3167 = vmul.f32 %v3117, %v3151
    %v3168 = vadd.f32 %v3160, %v3161
    %v3169 = vadd.f32 %v3168, %v3162
    %v3170 = vadd.f32 %v3169, %v3163
    %v3171 = vadd.f32 %v3170, %v3164
    %v3172 = vadd.f32 %v3171, %v3165
    %v3173 = vadd.f32 %v3172, %v3166
    %v3174 = vadd.f32 %v3173, %v3167
    %3175 = vadd.xlane.f32.xlu0 %v3174
    %v3176 = vpop.xlane.xlu0 %3175
    %v3177 = vld [vmem:[#allocation2] sm:$0x1]
    %v3179 = vlaneseq
    %v3180 = vshrl.u32 %v3179, 7
    %v3181 = vsub.s32 0, %v3180
    %v3182 = vrot.slane %v3177, %v3181
    %v3184 = vadd.f32 %v3176, %v3182
    %vm3185 = vcmask 7168
    %3186 = vst.msk [vmem:[%s11] sm:$0xff] %vm3185, %v3184
    %v3187 = vld [vmem:[%s7] sm:$0x1]
    %v3188 = vld [vmem:[#allocation9] sm:$0xff]
    %v3189 = vld [vmem:[#allocation9 + $0x8] sm:$0xff]
    %v3190 = vld [vmem:[#allocation9 + $0x10] sm:$0xff]
    %v3191 = vld [vmem:[#allocation9 + $0x18] sm:$0xff]
    %v3192 = vld [vmem:[#allocation9 + $0x20] sm:$0xff]
    %v3193 = vld [vmem:[#allocation9 + $0x28] sm:$0xff]
    %v3194 = vld [vmem:[#allocation9 + $0x30] sm:$0xff]
    %v3195 = vld [vmem:[#allocation9 + $0x38] sm:$0xff]
    %v3196 = vld [vmem:[%s10] sm:$0x1]
    %vm3197 = vcmask 523264
    %v3199 = vsel %vm3197, %v3187, 0
    %3201 = vmatprep.subr.mxu0 0.0
    %3202 = vmatpush1.msra.mxu0 %v3188
    %3203 = vmatprep.subr.mxu0 0.0
    %3204 = vmatpush1.msra.mxu0 %v3189
    %3205 = vmatprep.subr.mxu0 0.0
    %3206 = vmatpush1.msra.mxu0 %v3190
    %3207 = vmatprep.subr.mxu0 0.0
    %3208 = vmatpush1.msra.mxu0 %v3191
    %3209 = vmatprep.subr.mxu0 0.0
    %3210 = vmatpush1.msra.mxu0 %v3192
    %3211 = vmatprep.subr.mxu0 0.0
    %3212 = vmatpush1.msra.mxu0 %v3193
    %3213 = vmatprep.subr.mxu0 0.0
    %3214 = vmatpush1.msra.mxu0 %v3194
    %3215 = vmatprep.subr.mxu0 0.0
    %3216 = vmatpush1.msra.mxu0 %v3195
    %3217 = vmatprep.subr.mxu0 0.0
    %3218 = vmatpush1.msra.mxu0 0.0
    %3219 = vmatprep.subr.mxu0 0.0
    %3220 = vmatpush1.msra.mxu0 0.0
    %3221 = vmatprep.subr.mxu0 0.0
    %3222 = vmatpush1.msra.mxu0 0.0
    %3223 = vmatprep.subr.mxu0 0.0
    %3224 = vmatpush1.msra.mxu0 0.0
    %3225 = vmatprep.subr.mxu0 0.0
    %3226 = vmatpush1.msra.mxu0 0.0
    %3227 = vmatprep.subr.mxu0 0.0
    %3228 = vmatpush1.msra.mxu0 0.0
    %3229 = vmatprep.subr.mxu0 0.0
    %3230 = vmatpush1.msra.mxu0 0.0
    %3231 = vmatprep.subr.mxu0 0.0
    %3232 = vmatpush1.msra.mxu0 0.0
    %3233 = vmatprep.subr.mxu0 0.0
    %3234 = vmatpush1.msra.mxu0 0.0
    %3235 = vmatprep.subr.mxu0 0.0
    %3236 = vmatpush1.msra.mxu0 0.0
    %3237 = vmatprep.subr.mxu0 0.0
    %3238 = vmatpush1.msra.mxu0 0.0
    %3239 = vmatprep.subr.mxu0 0.0
    %3240 = vmatpush1.msra.mxu0 0.0
    %3241 = vmatprep.subr.mxu0 0.0
    %3242 = vmatpush1.msra.mxu0 0.0
    %3243 = vmatprep.subr.mxu0 0.0
    %3244 = vmatpush1.msra.mxu0 0.0
    %3245 = vmatprep.subr.mxu0 0.0
    %3246 = vmatpush1.msra.mxu0 0.0
    %3247 = vmatprep.subr.mxu0 0.0
    %3248 = vmatpush1.msra.mxu0 0.0
    %3249 = vmatprep.subr.mxu0 0.0
    %3250 = vmatpush1.msra.mxu0 0.0
    %3251 = vmatprep.subr.mxu0 0.0
    %3252 = vmatpush1.msra.mxu0 0.0
    %3253 = vmatprep.subr.mxu0 0.0
    %3254 = vmatpush1.msra.mxu0 0.0
    %3255 = vmatprep.subr.mxu0 0.0
    %3256 = vmatpush1.msra.mxu0 0.0
    %3257 = vmatprep.subr.mxu0 0.0
    %3258 = vmatpush1.msra.mxu0 0.0
    %3259 = vmatprep.subr.mxu0 0.0
    %3260 = vmatpush1.msra.mxu0 0.0
    %3261 = vmatprep.subr.mxu0 0.0
    %3262 = vmatpush1.msra.mxu0 0.0
    %3263 = vmatprep.subr.mxu0 0.0
    %3264 = vmatpush1.msra.mxu0 0.0
    %3265 = vmatprep.mubr.f32.mxu0 0.0
    %3266 = vmatmul.mubr.f32.gmra.mrb[0].mxu0 %v3199
    %v3267 = vpop.f32.mrb[0].mxu0
    %v3268 = vadd.f32 %v3196, %v3267
    %v3269 = vpop.f32.mrb[0].mxu0
    %3270 = vdwg.mxu0
    %v3271 = vxor.u32 %v3268, 2147483648
    %v3272 = vmul.f32 %v3271, 1.442695
    %v3273 = vpow.pop %v3272
    %v3274 = vadd.f32 %v3273, 1.0
    %v3275 = vrcp.pop %v3274
    %v3276 = vmul.f32 1.0, %v3275
    %v3277 = vtanh.pop %v3268
    %v3278 = vld [vmem:[%s8] sm:$0x1]
    %v3280 = vlaneseq
    %v3281 = vshrl.u32 %v3280, 7
    %v3282 = vsub.s32 0, %v3281
    %v3283 = vrot.slane %v3278, %v3282
    %3284 = vrot.lane.b32.xlu0 %v3283, 32
    %v3285 = vpop.permute.xlu0 %3284
    %v3287 = vmul.f32 %v3276, %v3285
    %3289 = vrot.lane.b32.xlu0 %v3277, 64
    %v3290 = vpop.permute.xlu0 %3289
    %v3292 = vmul.f32 %v3276, %v3290
    %3294 = vrot.lane.b32.xlu0 %v3292, 32
    %v3295 = vpop.permute.xlu0 %3294
    %v3297 = vadd.f32 %v3287, %v3295
    %v3298 = vtanh.pop %v3297
    %3300 = vrot.lane.b32.xlu0 %v3298, 64
    %v3301 = vpop.permute.xlu0 %3300
    %v3303 = vmul.f32 %v3276, %v3301
    %3305 = vrot.lane.b32.xlu0 %v3303, 32
    %v3306 = vpop.permute.xlu0 %3305
    %vm3308 = vcmask 253952
    %3309 = vst.msk [vmem:[#allocation11] sm:$0x1] %vm3308, %v3306
    %3311 = vrot.lane.b32.xlu0 %v3297, 96
    %v3312 = vpop.permute.xlu0 %3311
    %3314 = vst.msk [vmem:[%s13] sm:$0x1] %vm3308, %v3312
    // Predicated region
    $region62: #{_arg_policy_fused.1} parent=1 // pred_check
      _
    $region63: #{_arg_policy_fused.1} parent=1 // pred_check_branch
      %3316 = sbr.rel (0) target = $region65
    $region64: #{_arg_policy_fused.1} parent=1 // pred_region
      _
    $region65: #{_arg_policy_fused.1} parent=1 // pred_fallthru
      _
    // Predicated region
    $region66: #{_arg_policy_fused.1} parent=1 // pred_check
      _
    $region67: #{_arg_policy_fused.1} parent=1 // pred_check_branch
      %3318 = sbr.rel (0) target = $region69
    $region68: #{_arg_policy_fused.1} parent=1 // pred_region
      %s3320 = ssub.s32 16, 16
      %3321 = vsyncadd [#allocation5], %s3320
      %s3323 = sshll.u32 [#allocation11], 4
      %s3324 = int_to_ptr.vmem [resolvable:$true] %s3323
      %3326 = dma.vmem_to_hbm [thread:$0]  %s3324, 16, %s12, [#allocation5]
    $region69: #{_arg_policy_fused.1} parent=1 // pred_fallthru
      _
    // Predicated region
    $region70: #{_arg_policy_fused.1} parent=1 // pred_check
      _
    $region71: #{_arg_policy_fused.1} parent=1 // pred_check_branch
      %3328 = sbr.rel (0) target = $region73
    $region72: #{_arg_policy_fused.1} parent=1 // pred_region
      _
    $region73: #{_arg_policy_fused.1} parent=1 // pred_fallthru
      _
    // Predicated region
    $region74: #{_arg_policy_fused.1} parent=1 // pred_check
      _
    $region75: #{_arg_policy_fused.1} parent=1 // pred_check_branch
      %3330 = sbr.rel (0) target = $region77
    $region76: #{_arg_policy_fused.1} parent=1 // pred_region
      _
    $region77: #{_arg_policy_fused.1} parent=1 // pred_fallthru
      _
    // Predicated region
    $region78: #{_arg_policy_fused.1} parent=1 // pred_check
      _
    $region79: #{_arg_policy_fused.1} parent=1 // pred_check_branch
      %3332 = sbr.rel (0) target = $region81
    $region80: #{_arg_policy_fused.1} parent=1 // pred_region
      %3333 = dma.done [#allocation5], 16
    $region81: #{_arg_policy_fused.1} parent=1 // pred_fallthru
      _
    // Predicated region
    $region82: #{_arg_policy_fused.1} parent=1 // pred_check
      _
    $region83: #{_arg_policy_fused.1} parent=1 // pred_check_branch
      %3335 = sbr.rel (0) target = $region85
    $region84: #{_arg_policy_fused.1} parent=1 // pred_region
      _
    $region85: #{_arg_policy_fused.1} parent=1 // pred_fallthru
      _
    %3336 = vsyncpa [#allocation4], 1
    %3337 = vsyncpa [#allocation7], 1
    %3338 = vsyncpa [#allocation10], 1
    %3339 = vsyncpa [#allocation5], 1

</llo_original>
